<compile_context>
chip_gen: v5e
topology: v5e:2x2
jax: 0.10.0
libtpu: 0.0.40
codegen_flags: <defaults>
</compile_context>

<pallas_src>
import functools

import jax
import jax.numpy as jnp
from jax import lax
from jax.experimental import pallas as pl
from jax.experimental.pallas import tpu as pltpu

_NEG = -1e30   # plain Python float (finite "-inf"): safe to use inside the kernel trace


def _clip_loss_kernel(scale_ref, img_ref, txt_ref, *refs,
                      n, n_pad, tile, with_logits, text_resident):
    if with_logits:
        (lpi_ref, lpt_ref, loss_ref,
         m_img_ref, l_img_ref, m_txt_ref, l_txt_ref, diag_ref) = refs
    else:
        lpi_ref = lpt_ref = None
        (loss_ref,
         m_img_ref, l_img_ref, m_txt_ref, l_txt_ref, diag_ref) = refs

    i = pl.program_id(0)     # row block (image rows)
    j = pl.program_id(1)     # column block (text rows)
    nr = pl.num_programs(0)
    nc = pl.num_programs(1)

    # ---- init running stats on the very first grid step ----
    @pl.when((i == 0) & (j == 0))
    def _init():
        m_img_ref[...] = jnp.full(m_img_ref.shape, _NEG, jnp.float32)
        l_img_ref[...] = jnp.zeros(l_img_ref.shape, jnp.float32)
        m_txt_ref[...] = jnp.full(m_txt_ref.shape, _NEG, jnp.float32)
        l_txt_ref[...] = jnp.zeros(l_txt_ref.shape, jnp.float32)

    img = img_ref[...]                                            # (tile, D), native dtype
    if text_resident:
        txt = txt_ref[pl.ds(pl.multiple_of(j * tile, tile), tile), :]   # slice of resident text
    else:
        txt = txt_ref[...]                                        # (tile, D)

    # Single MXU matmul per tile (f32 accumulate), contracting dim 1 of both operands.
    raw = lax.dot_general(img, txt, (((1,), (1,)), ((), ())),
                          preferred_element_type=jnp.float32)     # (tile, tile)
    s = scale_ref[0, 0]
    tile_scaled = raw * s                 # post-scale the f32 accumulator (exact vs reference)
    tile_scaled_t = tile_scaled.T         # XLU transpose; reused for lpt write AND row stats

    if with_logits:
        lpi_ref[...] = tile_scaled.astype(lpi_ref.dtype)
        # logits_per_text = logits_per_image.T -> written to the (j, i) block via swapped out_spec.
        lpt_ref[...] = tile_scaled_t.astype(lpt_ref.dtype)

    if n != n_pad:   # trace-time decision: mask padded rows/cols out of the CE statistics
        gr = lax.broadcasted_iota(jnp.int32, (tile, tile), 0) + i * tile
        gc = lax.broadcasted_iota(jnp.int32, (tile, tile), 1) + j * tile
        logits = jnp.where((gr < n) & (gc < n), tile_scaled, _NEG)
        gr_t = lax.broadcasted_iota(jnp.int32, (tile, tile), 0) + j * tile
        gc_t = lax.broadcasted_iota(jnp.int32, (tile, tile), 1) + i * tile
        logits_t = jnp.where((gr_t < n) & (gc_t < n), tile_scaled_t, _NEG)
    else:
        logits = tile_scaled
        logits_t = tile_scaled_t

    r_sl = pl.ds(pl.multiple_of(i * tile, tile), tile)
    c_sl = pl.ds(pl.multiple_of(j * tile, tile), tile)

    # ---- online logsumexp over rows (image-direction CE): columns of the transposed tile ----
    mi_old = m_img_ref[:, r_sl]                                   # (1, tile) lane-major
    li_old = l_img_ref[:, r_sl]
    mi_new = jnp.maximum(mi_old, jnp.max(logits_t, axis=0, keepdims=True))
    li_new = (jnp.exp(mi_old - mi_new) * li_old
              + jnp.sum(jnp.exp(logits_t - mi_new), axis=0, keepdims=True))
    m_img_ref[:, r_sl] = mi_new
    l_img_ref[:, r_sl] = li_new

    # ---- online logsumexp over columns (text-direction CE) ----
    mt_old = m_txt_ref[:, c_sl]                                   # (1, tile) lane-major
    lt_old = l_txt_ref[:, c_sl]
    mt_new = jnp.maximum(mt_old, jnp.max(logits, axis=0, keepdims=True))
    lt_new = (jnp.exp(mt_old - mt_new) * lt_old
              + jnp.sum(jnp.exp(logits - mt_new), axis=0, keepdims=True))
    m_txt_ref[:, c_sl] = mt_new
    l_txt_ref[:, c_sl] = lt_new

    # ---- diagonal logits (labels == arange): extracted from the scaled tile on diagonal
    #      blocks only (bit-identical to lpi[i, i]); padded diagonal entries are exactly 0. ----
    @pl.when(i == j)
    def _diag():
        rr = lax.broadcasted_iota(jnp.int32, (tile, tile), 0)
        cc = lax.broadcasted_iota(jnp.int32, (tile, tile), 1)
        diag_ref[:, r_sl] = jnp.sum(jnp.where(rr == cc, tile_scaled, 0.0),
                                    axis=0, keepdims=True)

    # ---- finalize: loss = (CE_img + CE_txt) / 2 ----
    @pl.when((i == nr - 1) & (j == nc - 1))
    def _finalize():
        lse_img = m_img_ref[...] + jnp.log(l_img_ref[...])        # (1, n_pad)
        lse_txt = m_txt_ref[...] + jnp.log(l_txt_ref[...])        # (1, n_pad)
        if n != n_pad:
            valid = lax.broadcasted_iota(jnp.int32, (1, n_pad), 1) < n
            sum_img = jnp.sum(jnp.where(valid, lse_img, 0.0))
            sum_txt = jnp.sum(jnp.where(valid, lse_txt, 0.0))
        else:
            sum_img = jnp.sum(lse_img)
            sum_txt = jnp.sum(lse_txt)
        dsum = jnp.sum(diag_ref[...])
        # loss = 0.5 * (mean_i(lse_img_i - diag_i) + mean_i(lse_txt_i - diag_i))
        loss_ref[0, 0] = (sum_img + sum_txt - 2.0 * dsum) / jnp.float32(2 * n)


def clip_loss(image_features, text_features, logit_scale, *,
              tile=256, return_logits=True, logits_dtype=None, text_resident=None):
    """ClipLoss.forward (world_size == 1).

    Returns (total_loss, logits_per_image, logits_per_text) when return_logits=True,
    else just total_loss (skips the dominant 2*N^2 HBM logits writes).
    """
    n, d = image_features.shape
    assert text_features.shape == (n, d)

    tile = min(tile, max(128, pl.cdiv(n, 128) * 128))   # don't over-pad small batches
    n_blocks = pl.cdiv(n, tile)
    n_pad = n_blocks * tile
    if n_pad != n:
        pad = n_pad - n
        image_features = jnp.pad(image_features, ((0, pad), (0, 0)))
        text_features = jnp.pad(text_features, ((0, pad), (0, 0)))

    if logits_dtype is None:
        logits_dtype = image_features.dtype
    if text_resident is None:
        # Keep the whole text matrix resident in VMEM when modest (conservative across v5e/v6e/v7x,
        # accounting for double buffering); removes the O(N^2 * D / tile) text re-read.
        text_resident = n_pad * d * jnp.dtype(text_features.dtype).itemsize <= 4 * 1024 * 1024

    scale = jnp.asarray(logit_scale, jnp.float32).reshape((1, 1))

    kernel = functools.partial(_clip_loss_kernel, n=n, n_pad=n_pad, tile=tile,
                               with_logits=return_logits, text_resident=text_resident)

    if text_resident:
        txt_spec = pl.BlockSpec((n_pad, d), lambda i, j: (0, 0))       # DMA'd once, stays resident
    else:
        txt_spec = pl.BlockSpec((tile, d), lambda i, j: (j, 0))        # streamed per column block

    in_specs = [
        pl.BlockSpec((1, 1), lambda i, j: (0, 0),
                     memory_space=pltpu.MemorySpace.SMEM),              # logit_scale
        pl.BlockSpec((tile, d), lambda i, j: (i, 0)),                   # image_features block i
        txt_spec,                                                       # text_features
    ]

    loss_shape = jax.ShapeDtypeStruct((1, 1), jnp.float32)
    loss_spec = pl.BlockSpec((1, 1), lambda i, j: (0, 0),
                             memory_space=pltpu.MemorySpace.SMEM)

    if return_logits:
        out_shape = (
            jax.ShapeDtypeStruct((n_pad, n_pad), logits_dtype),         # logits_per_image
            jax.ShapeDtypeStruct((n_pad, n_pad), logits_dtype),         # logits_per_text
            loss_shape,                                                  # total_loss
        )
        out_specs = (
            pl.BlockSpec((tile, tile), lambda i, j: (i, j)),             # lpi tile
            pl.BlockSpec((tile, tile), lambda i, j: (j, i)),             # lpt tile (transposed write)
            loss_spec,
        )
    else:
        out_shape = (loss_shape,)
        out_specs = (loss_spec,)

    scratch_shapes = [
        pltpu.VMEM((1, n_pad), jnp.float32),    # m_img (running row max), lane-major
        pltpu.VMEM((1, n_pad), jnp.float32),    # l_img (running row sum-exp)
        pltpu.VMEM((1, n_pad), jnp.float32),    # m_txt (running column max)
        pltpu.VMEM((1, n_pad), jnp.float32),    # l_txt (running column sum-exp)
        pltpu.VMEM((1, n_pad), jnp.float32),    # diag  (scaled diagonal logits)
    ]

    outs = pl.pallas_call(
        kernel,
        out_shape=out_shape,
        grid_spec=pltpu.PrefetchScalarGridSpec(
            num_scalar_prefetch=0,
            grid=(n_blocks, n_blocks),
            in_specs=in_specs,
            out_specs=out_specs,
            scratch_shapes=scratch_shapes,
        ),
        compiler_params=pltpu.CompilerParams(
            # Both axes sequential: the shared row/column accumulators and the single final
            # reduction need one TensorCore walking the whole grid (see v7x TODO above).
            dimension_semantics=("arbitrary", "arbitrary"),
            vmem_limit_bytes=32 * 1024 * 1024,
        ),
    )(scale, image_features, text_features)

    if return_logits:
        lpi, lpt, loss = outs
        if n_pad != n:
            lpi = lpi[:n, :n]
            lpt = lpt[:n, :n]
        return loss[0, 0], lpi, lpt
    (loss,) = outs
    return loss[0, 0]


def _reference(image_features, text_features, logit_scale):
    lpi = logit_scale * image_features @ text_features.T
    lpt = logit_scale * text_features @ image_features.T
    labels = jnp.arange(lpi.shape[0])

    def ce(logits):
        logp = jax.nn.log_softmax(logits, axis=-1)
        return -jnp.mean(logp[jnp.arange(logits.shape[0]), labels])

    return (ce(lpi) + ce(lpt)) / 2.0, lpi, lpt


if __name__ == "__main__":
    key = jax.random.PRNGKey(0)
    dim = 64
    logit_scale = jnp.float32(2.6592)   # exp(learnable temperature), deterministic value

    # (batch, tile, text_resident): exact-fit single block, padded single block (streamed text),
    # and padded multi-block (exercises masking, transposed writes, online accumulation).
    cases = ((256, 256, False), (200, 256, None), (200, 128, None))
    for batch, tile, resident in cases:
        k_img, k_txt = jax.random.split(jax.random.fold_in(key, batch * 1000 + tile))
        img = jax.random.normal(k_img, (batch, dim), dtype=jnp.float32)
        txt = jax.random.normal(k_txt, (batch, dim), dtype=jnp.float32)
        # L2-normalize as in typical CLIP usage (does not change loss semantics).
        img = img / jnp.linalg.norm(img, axis=-1, keepdims=True)
        txt = txt / jnp.linalg.norm(txt, axis=-1, keepdims=True)

        loss, lpi, lpt = clip_loss(img, txt, logit_scale, tile=tile, text_resident=resident)
        jax.block_until_ready((loss, lpi, lpt))

        ref_loss, ref_lpi, ref_lpt = _reference(img, txt, logit_scale)
        assert jnp.allclose(lpi, ref_lpi, atol=1e-4, rtol=1e-4), (batch, tile, "lpi mismatch")
        assert jnp.allclose(lpt, ref_lpt, atol=1e-4, rtol=1e-4), (batch, tile, "lpt mismatch")
        assert jnp.allclose(loss, ref_loss, atol=1e-4, rtol=1e-4), (batch, tile, loss, ref_loss)

        # loss-only fast path (no N^2 logits write-back)
        loss_only = clip_loss(img, txt, logit_scale, tile=tile, text_resident=resident,
                              return_logits=False)
        jax.block_until_ready(loss_only)
        assert jnp.allclose(loss_only, ref_loss, atol=1e-4, rtol=1e-4), (batch, tile, loss_only)

    print("KERNEL_OK")
</pallas_src>

<mosaic_0001>
module attributes {stable_mosaic.version = 11 : i64} {
  func.func @_clip_loss_kernel(%arg0: i32, %arg1: i32, %arg2: memref<1x1xf32, #tpu.memory_space<smem>>, %arg3: memref<256x64xf32, #tpu.memory_space<vmem>>, %arg4: memref<256x64xf32, #tpu.memory_space<vmem>>, %arg5: memref<256x256xf32, #tpu.memory_space<vmem>>, %arg6: memref<256x256xf32, #tpu.memory_space<vmem>>, %arg7: memref<1x1xf32, #tpu.memory_space<smem>>, %arg8: memref<1x256xf32, #tpu.memory_space<vmem>>, %arg9: memref<1x256xf32, #tpu.memory_space<vmem>>, %arg10: memref<1x256xf32, #tpu.memory_space<vmem>>, %arg11: memref<1x256xf32, #tpu.memory_space<vmem>>, %arg12: memref<1x256xf32, #tpu.memory_space<vmem>>) attributes {dimension_semantics = [#tpu.dimension_semantics<arbitrary>, #tpu.dimension_semantics<arbitrary>], iteration_bounds = array<i64: 1, 1>, scalar_prefetch = 0 : i64, scratch_operands = 5 : i64, tpu.core_type = #tpu.core_type<tc>, window_params = [{transform_indices = @transform_0, window_bounds = array<i64: 1, 1>}, {transform_indices = @transform_1, window_bounds = array<i64: 256, 64>}, {transform_indices = @transform_2, window_bounds = array<i64: 256, 64>}, {transform_indices = @transform_3, window_bounds = array<i64: 256, 256>}, {transform_indices = @transform_4, window_bounds = array<i64: 256, 256>}, {transform_indices = @transform_5, window_bounds = array<i64: 1, 1>}]} {
    %c0_i32 = arith.constant 0 : i32
    %0 = arith.cmpi eq, %arg0, %c0_i32 : i32
    %c0_i32_0 = arith.constant 0 : i32
    %1 = arith.cmpi eq, %arg1, %c0_i32_0 : i32
    %2 = arith.andi %0, %1 : i1
    %3 = arith.extui %2 : i1 to i32
    %c0_i32_1 = arith.constant 0 : i32
    %4 = arith.cmpi ne, %3, %c0_i32_1 : i32
    scf.if %4 {
      %cst_28 = arith.constant -1.000000e+30 : f32
      %66 = vector.broadcast %cst_28 : f32 to vector<1x256xf32>
      %c0_29 = arith.constant 0 : index
      %c0_30 = arith.constant 0 : index
      %67 = vector.load %arg8[%c0_29, %c0_30] : memref<1x256xf32, #tpu.memory_space<vmem>>, vector<1x256xf32>
      tpu.vector_store %arg8[%c0_29, %c0_30], %66 {strides = array<i32>} : memref<1x256xf32, #tpu.memory_space<vmem>>, vector<1x256xf32>,
      %cst_31 = arith.constant 0.000000e+00 : f32
      %68 = vector.broadcast %cst_31 : f32 to vector<1x256xf32>
      %c0_32 = arith.constant 0 : index
      %c0_33 = arith.constant 0 : index
      %69 = vector.load %arg9[%c0_32, %c0_33] : memref<1x256xf32, #tpu.memory_space<vmem>>, vector<1x256xf32>
      tpu.vector_store %arg9[%c0_32, %c0_33], %68 {strides = array<i32>} : memref<1x256xf32, #tpu.memory_space<vmem>>, vector<1x256xf32>,
      %cst_34 = arith.constant -1.000000e+30 : f32
      %70 = vector.broadcast %cst_34 : f32 to vector<1x256xf32>
      %c0_35 = arith.constant 0 : index
      %c0_36 = arith.constant 0 : index
      %71 = vector.load %arg10[%c0_35, %c0_36] : memref<1x256xf32, #tpu.memory_space<vmem>>, vector<1x256xf32>
      tpu.vector_store %arg10[%c0_35, %c0_36], %70 {strides = array<i32>} : memref<1x256xf32, #tpu.memory_space<vmem>>, vector<1x256xf32>,
      %cst_37 = arith.constant 0.000000e+00 : f32
      %72 = vector.broadcast %cst_37 : f32 to vector<1x256xf32>
      %c0_38 = arith.constant 0 : index
      %c0_39 = arith.constant 0 : index
      %73 = vector.load %arg11[%c0_38, %c0_39] : memref<1x256xf32, #tpu.memory_space<vmem>>, vector<1x256xf32>
      tpu.vector_store %arg11[%c0_38, %c0_39], %72 {strides = array<i32>} : memref<1x256xf32, #tpu.memory_space<vmem>>, vector<1x256xf32>,
    } else {
    }
    %c0 = arith.constant 0 : index
    %c0_2 = arith.constant 0 : index
    %5 = vector.load %arg3[%c0, %c0_2] : memref<256x64xf32, #tpu.memory_space<vmem>>, vector<256x64xf32>
    %c0_3 = arith.constant 0 : index
    %c0_4 = arith.constant 0 : index
    %6 = vector.load %arg4[%c0_3, %c0_4] : memref<256x64xf32, #tpu.memory_space<vmem>>, vector<256x64xf32>
    %cst = arith.constant dense<0.000000e+00> : vector<256x256xf32>
    %7 = tpu.matmul %5, %6, %cst {dimension_numbers = #tpu.dot_dimension_numbers<[1], [1], [0], [0], [0, 0, 1, 0], [], []>} : vector<256x64xf32>, vector<256x64xf32>, vector<256x256xf32> -> vector<256x256xf32>
    %c0_5 = arith.constant 0 : index
    %c0_6 = arith.constant 0 : index
    %8 = memref.load %arg2[%c0_5, %c0_6] : memref<1x1xf32, #tpu.memory_space<smem>>
    %9 = vector.broadcast %8 : f32 to vector<256x256xf32>
    %10 = arith.mulf %7, %9 : vector<256x256xf32>
    %11 = tpu.transpose %10, [1, 0] : vector<256x256xf32> -> vector<256x256xf32>
    %c0_7 = arith.constant 0 : index
    %c0_8 = arith.constant 0 : index
    %12 = vector.load %arg5[%c0_7, %c0_8] : memref<256x256xf32, #tpu.memory_space<vmem>>, vector<256x256xf32>
    tpu.vector_store %arg5[%c0_7, %c0_8], %10 {strides = array<i32>} : memref<256x256xf32, #tpu.memory_space<vmem>>, vector<256x256xf32>,
    %c0_9 = arith.constant 0 : index
    %c0_10 = arith.constant 0 : index
    %13 = vector.load %arg6[%c0_9, %c0_10] : memref<256x256xf32, #tpu.memory_space<vmem>>, vector<256x256xf32>
    tpu.vector_store %arg6[%c0_9, %c0_10], %11 {strides = array<i32>} : memref<256x256xf32, #tpu.memory_space<vmem>>, vector<256x256xf32>,
    %c256_i32 = arith.constant 256 : i32
    %14 = arith.muli %arg0, %c256_i32 : i32
    %15 = tpu.assume_multiple %14, 256 : i32
    %c256_i32_11 = arith.constant 256 : i32
    %16 = arith.muli %arg1, %c256_i32_11 : i32
    %17 = tpu.assume_multiple %16, 256 : i32
    %c0_12 = arith.constant 0 : index
    %18 = arith.index_cast %15 : i32 to index
    %19 = vector.load %arg8[%c0_12, %18] : memref<1x256xf32, #tpu.memory_space<vmem>>, vector<1x256xf32>
    %c0_13 = arith.constant 0 : index
    %20 = arith.index_cast %15 : i32 to index
    %21 = vector.load %arg9[%c0_13, %20] : memref<1x256xf32, #tpu.memory_space<vmem>>, vector<1x256xf32>
    %cst_14 = arith.constant dense<0xFF800000> : vector<256xf32>
    %22 = vector.multi_reduction <maximumf>, %11, %cst_14 [0] : vector<256x256xf32> to vector<256xf32>
    %23 = vector.shape_cast %22 : vector<256xf32> to vector<1x256xf32>
    %24 = arith.maximumf %19, %23 : vector<1x256xf32>
    %25 = arith.subf %19, %24 : vector<1x256xf32>
    %26 = math.exp %25 : vector<1x256xf32>
    %27 = arith.mulf %26, %21 : vector<1x256xf32>
    %28 = vector.broadcast %24 : vector<1x256xf32> to vector<256x256xf32>
    %29 = arith.subf %11, %28 : vector<256x256xf32>
    %30 = math.exp %29 : vector<256x256xf32>
    %cst_15 = arith.constant dense<0.000000e+00> : vector<256xf32>
    %31 = vector.multi_reduction <add>, %30, %cst_15 [0] : vector<256x256xf32> to vector<256xf32>
    %32 = vector.shape_cast %31 : vector<256xf32> to vector<1x256xf32>
    %33 = arith.addf %27, %32 : vector<1x256xf32>
    %c0_16 = arith.constant 0 : index
    %34 = arith.index_cast %15 : i32 to index
    %35 = vector.load %arg8[%c0_16, %34] : memref<1x256xf32, #tpu.memory_space<vmem>>, vector<1x256xf32>
    tpu.vector_store %arg8[%c0_16, %34], %24 {strides = array<i32>} : memref<1x256xf32, #tpu.memory_space<vmem>>, vector<1x256xf32>,
    %c0_17 = arith.constant 0 : index
    %36 = arith.index_cast %15 : i32 to index
    %37 = vector.load %arg9[%c0_17, %36] : memref<1x256xf32, #tpu.memory_space<vmem>>, vector<1x256xf32>
    tpu.vector_store %arg9[%c0_17, %36], %33 {strides = array<i32>} : memref<1x256xf32, #tpu.memory_space<vmem>>, vector<1x256xf32>,
    %c0_18 = arith.constant 0 : index
    %38 = arith.index_cast %17 : i32 to index
    %39 = vector.load %arg10[%c0_18, %38] : memref<1x256xf32, #tpu.memory_space<vmem>>, vector<1x256xf32>
    %c0_19 = arith.constant 0 : index
    %40 = arith.index_cast %17 : i32 to index
    %41 = vector.load %arg11[%c0_19, %40] : memref<1x256xf32, #tpu.memory_space<vmem>>, vector<1x256xf32>
    %cst_20 = arith.constant dense<0xFF800000> : vector<256xf32>
    %42 = vector.multi_reduction <maximumf>, %10, %cst_20 [0] : vector<256x256xf32> to vector<256xf32>
    %43 = vector.shape_cast %42 : vector<256xf32> to vector<1x256xf32>
    %44 = arith.maximumf %39, %43 : vector<1x256xf32>
    %45 = arith.subf %39, %44 : vector<1x256xf32>
    %46 = math.exp %45 : vector<1x256xf32>
    %47 = arith.mulf %46, %41 : vector<1x256xf32>
    %48 = vector.broadcast %44 : vector<1x256xf32> to vector<256x256xf32>
    %49 = arith.subf %10, %48 : vector<256x256xf32>
    %50 = math.exp %49 : vector<256x256xf32>
    %cst_21 = arith.constant dense<0.000000e+00> : vector<256xf32>
    %51 = vector.multi_reduction <add>, %50, %cst_21 [0] : vector<256x256xf32> to vector<256xf32>
    %52 = vector.shape_cast %51 : vector<256xf32> to vector<1x256xf32>
    %53 = arith.addf %47, %52 : vector<1x256xf32>
    %c0_22 = arith.constant 0 : index
    %54 = arith.index_cast %17 : i32 to index
    %55 = vector.load %arg10[%c0_22, %54] : memref<1x256xf32, #tpu.memory_space<vmem>>, vector<1x256xf32>
    tpu.vector_store %arg10[%c0_22, %54], %44 {strides = array<i32>} : memref<1x256xf32, #tpu.memory_space<vmem>>, vector<1x256xf32>,
    %c0_23 = arith.constant 0 : index
    %56 = arith.index_cast %17 : i32 to index
    %57 = vector.load %arg11[%c0_23, %56] : memref<1x256xf32, #tpu.memory_space<vmem>>, vector<1x256xf32>
    tpu.vector_store %arg11[%c0_23, %56], %53 {strides = array<i32>} : memref<1x256xf32, #tpu.memory_space<vmem>>, vector<1x256xf32>,
    %58 = arith.cmpi eq, %arg0, %arg1 : i32
    %59 = arith.extui %58 : i1 to i32
    %c0_i32_24 = arith.constant 0 : i32
    %60 = arith.cmpi ne, %59, %c0_i32_24 : i32
    scf.if %60 {
      %66 = tpu.iota {dimensions = array<i32: 0>} : vector<256x256xi32>
      %67 = tpu.iota {dimensions = array<i32: 1>} : vector<256x256xi32>
      %68 = arith.cmpi eq, %66, %67 : vector<256x256xi32>
      %cst_28 = arith.constant 0.000000e+00 : f32
      %69 = vector.broadcast %cst_28 : f32 to vector<256x256xf32>
      %70 = arith.select %68, %10, %69 : vector<256x256xi1>, vector<256x256xf32>
      %cst_29 = arith.constant dense<0.000000e+00> : vector<256xf32>
      %71 = vector.multi_reduction <add>, %70, %cst_29 [0] : vector<256x256xf32> to vector<256xf32>
      %72 = vector.shape_cast %71 : vector<256xf32> to vector<1x256xf32>
      %c0_30 = arith.constant 0 : index
      %73 = arith.index_cast %15 : i32 to index
      %74 = vector.load %arg12[%c0_30, %73] : memref<1x256xf32, #tpu.memory_space<vmem>>, vector<1x256xf32>
      tpu.vector_store %arg12[%c0_30, %73], %72 {strides = array<i32>} : memref<1x256xf32, #tpu.memory_space<vmem>>, vector<1x256xf32>,
    } else {
    }
    %c0_i32_25 = arith.constant 0 : i32
    %61 = arith.cmpi eq, %arg0, %c0_i32_25 : i32
    %c0_i32_26 = arith.constant 0 : i32
    %62 = arith.cmpi eq, %arg1, %c0_i32_26 : i32
    %63 = arith.andi %61, %62 : i1
    %64 = arith.extui %63 : i1 to i32
    %c0_i32_27 = arith.constant 0 : i32
    %65 = arith.cmpi ne, %64, %c0_i32_27 : i32
    scf.if %65 {
      %c0_28 = arith.constant 0 : index
      %c0_29 = arith.constant 0 : index
      %66 = vector.load %arg8[%c0_28, %c0_29] : memref<1x256xf32, #tpu.memory_space<vmem>>, vector<1x256xf32>
      %c0_30 = arith.constant 0 : index
      %c0_31 = arith.constant 0 : index
      %67 = vector.load %arg9[%c0_30, %c0_31] : memref<1x256xf32, #tpu.memory_space<vmem>>, vector<1x256xf32>
      %68 = math.log %67 : vector<1x256xf32>
      %69 = arith.addf %66, %68 : vector<1x256xf32>
      %c0_32 = arith.constant 0 : index
      %c0_33 = arith.constant 0 : index
      %70 = vector.load %arg10[%c0_32, %c0_33] : memref<1x256xf32, #tpu.memory_space<vmem>>, vector<1x256xf32>
      %c0_34 = arith.constant 0 : index
      %c0_35 = arith.constant 0 : index
      %71 = vector.load %arg11[%c0_34, %c0_35] : memref<1x256xf32, #tpu.memory_space<vmem>>, vector<1x256xf32>
      %72 = math.log %71 : vector<1x256xf32>
      %73 = arith.addf %70, %72 : vector<1x256xf32>
      %74 = vector.shape_cast %69 : vector<1x256xf32> to vector<1x1x256xf32>
      %cst_36 = arith.constant dense<0.000000e+00> : vector<1xf32>
      %75 = vector.multi_reduction <add>, %74, %cst_36 [1, 2] : vector<1x1x256xf32> to vector<1xf32>
      %76 = vector.shape_cast %75 : vector<1xf32> to vector<1x1x1xf32>
      %77 = vector.extract %76[0, 0, 0] : f32 from vector<1x1x1xf32>
      %78 = vector.shape_cast %73 : vector<1x256xf32> to vector<1x1x256xf32>
      %cst_37 = arith.constant dense<0.000000e+00> : vector<1xf32>
      %79 = vector.multi_reduction <add>, %78, %cst_37 [1, 2] : vector<1x1x256xf32> to vector<1xf32>
      %80 = vector.shape_cast %79 : vector<1xf32> to vector<1x1x1xf32>
      %81 = vector.extract %80[0, 0, 0] : f32 from vector<1x1x1xf32>
      %c0_38 = arith.constant 0 : index
      %c0_39 = arith.constant 0 : index
      %82 = vector.load %arg12[%c0_38, %c0_39] : memref<1x256xf32, #tpu.memory_space<vmem>>, vector<1x256xf32>
      %83 = vector.shape_cast %82 : vector<1x256xf32> to vector<1x1x256xf32>
      %cst_40 = arith.constant dense<0.000000e+00> : vector<1xf32>
      %84 = vector.multi_reduction <add>, %83, %cst_40 [1, 2] : vector<1x1x256xf32> to vector<1xf32>
      %85 = vector.shape_cast %84 : vector<1xf32> to vector<1x1x1xf32>
      %86 = vector.extract %85[0, 0, 0] : f32 from vector<1x1x1xf32>
      %87 = arith.addf %77, %81 : f32
      %cst_41 = arith.constant 2.000000e+00 : f32
      %88 = arith.mulf %cst_41, %86 : f32
      %89 = arith.subf %87, %88 : f32
      %cst_42 = arith.constant 5.120000e+02 : f32
      %90 = arith.divf %89, %cst_42 : f32
      %c0_43 = arith.constant 0 : index
      %c0_44 = arith.constant 0 : index
      %91 = memref.load %arg7[%c0_43, %c0_44] : memref<1x1xf32, #tpu.memory_space<smem>>
      memref.store %90, %arg7[%c0_43, %c0_44] : memref<1x1xf32, #tpu.memory_space<smem>>
    } else {
    }
    return
  }
  func.func @transform_0(%arg0: i32, %arg1: i32) -> (i32, i32) {
    %c0_i32 = arith.constant 0 : i32
    %c0_i32_0 = arith.constant 0 : i32
    %c0_i32_1 = arith.constant 0 : i32
    return %c0_i32, %c0_i32_0 : i32, i32
  }
  func.func @transform_1(%arg0: i32, %arg1: i32) -> (i32, i32) {
    %c0_i32 = arith.constant 0 : i32
    %c0_i32_0 = arith.constant 0 : i32
    return %arg0, %c0_i32 : i32, i32
  }
  func.func @transform_2(%arg0: i32, %arg1: i32) -> (i32, i32) {
    %c0_i32 = arith.constant 0 : i32
    %c0_i32_0 = arith.constant 0 : i32
    return %arg1, %c0_i32 : i32, i32
  }
  func.func @transform_3(%arg0: i32, %arg1: i32) -> (i32, i32) {
    %c0_i32 = arith.constant 0 : i32
    return %arg0, %arg1 : i32, i32
  }
  func.func @transform_4(%arg0: i32, %arg1: i32) -> (i32, i32) {
    %c0_i32 = arith.constant 0 : i32
    return %arg1, %arg0 : i32, i32
  }
  func.func @transform_5(%arg0: i32, %arg1: i32) -> (i32, i32) {
    %c0_i32 = arith.constant 0 : i32
    %c0_i32_0 = arith.constant 0 : i32
    %c0_i32_1 = arith.constant 0 : i32
    return %c0_i32, %c0_i32_0 : i32, i32
  }
}

</mosaic_0001>

<llo_original>
// kernel: tpu_custom_call.1
$region0: #{tpu_custom_call.1}
  #allocation0 [shape = 'u32[]', space=smem, size = 0x4, offset = 0x4, fixed_abs, tag = 'smem constant byte address 0x4 - core index']
  #allocation1 [shape = 'u32[72,128]{1,0:T(1,128)}', space=vmem, size = 0x9000, scoped, tag = 'internal scratch']
  #allocation2 [shape = 'f32[1,256]{1,0:T(1,128)}', space=vmem, size = 0x400, scoped, tag = 'scratch operand']
  #allocation3 [shape = 'f32[1,256]{1,0:T(1,128)}', space=vmem, size = 0x400, scoped, tag = 'scratch operand']
  #allocation4 [shape = 'f32[1,256]{1,0:T(1,128)}', space=vmem, size = 0x400, scoped, tag = 'scratch operand']
  #allocation5 [shape = 'f32[1,256]{1,0:T(1,128)}', space=vmem, size = 0x400, scoped, tag = 'scratch operand']
  #allocation6 [shape = 'f32[1,256]{1,0:T(1,128)}', space=vmem, size = 0x400, scoped, tag = 'scratch operand']
  #allocation7 [shape = 'f32[1,1]{1,0:T(1,128)S(6)}', space=smem, size = 0x200, scoped, tag = 'scoped memory for tpu_custom_call.1']
  %s0 = inlined_call_operand.<no memory space> [shape: f32[1,1], index: 0, kind: input, shape index: {}]
  %s1 = inlined_call_operand.vmem [shape: f32[256,64], index: 1, kind: input, shape index: {}]
  %s2 = inlined_call_operand.vmem [shape: f32[256,64], index: 2, kind: input, shape index: {}]
  %s3 = inlined_call_operand.hbm [shape: f32[256,256], index: 3, kind: output, shape index: {0}]
  %s4 = inlined_call_operand.hbm [shape: f32[256,256], index: 4, kind: output, shape index: {1}]
  %s5 = inlined_call_operand.hbm [shape: f32[1,1], index: 5, kind: output, shape index: {2}]
  %6 = xla_tuple %s3, %s4, %s5
  %s7 = sld [smem:[#allocation0]]
  $region50: #{tpu_custom_call.1} parent=0
    _
  %s9 = ssub.s32 1, %s7
  %s10 = scalar_select 0, %s9, %s7
  %11 = sst [smem:[#allocation7]] %s0
  $region1: #{tpu_custom_call.1} parent=0
    #allocation8 [shape = 'u8[262144]{0}', space=vmem, size = 0x40000, scoped, tag = 'output window, operand 0, single buffered']
    #allocation9 [shape = 's32[1]{0}', space=sflag, size = 0x4, scoped, tag = 'scoped memory for tpu_custom_call.1']
    #allocation10 [shape = 's32[1]{0}', space=sflag, size = 0x4, scoped, tag = 'scoped memory for tpu_custom_call.1']
    #allocation11 [shape = 'u8[262144]{0}', space=vmem, size = 0x40000, scoped, tag = 'output window, operand 1, single buffered']
    #allocation12 [shape = 's32[1]{0}', space=sflag, size = 0x4, scoped, tag = 'scoped memory for tpu_custom_call.1']
    #allocation13 [shape = 'u8[512]{0}', space=smem, size = 0x200, scoped, tag = 'output window, operand 2, single buffered']
    %12 = vsyncpa [#allocation9], 0
    %13 = vsyncpa [#allocation12], 0
    %14 = vsyncpa [#allocation10], 0
    // Predicated region
    $region2: #{tpu_custom_call.1} parent=1 // pred_check
      _
    $region3: #{tpu_custom_call.1} parent=1 // pred_check_branch
      %16 = sbr.rel (0) target = $region5
    $region4: #{tpu_custom_call.1} parent=1 // pred_region
      _
    $region5: #{tpu_custom_call.1} parent=1 // pred_fallthru
      _
    // Predicated region
    $region6: #{tpu_custom_call.1} parent=1 // pred_check
      _
    $region7: #{tpu_custom_call.1} parent=1 // pred_check_branch
      %18 = sbr.rel (0) target = $region9
    $region8: #{tpu_custom_call.1} parent=1 // pred_region
      _
    $region9: #{tpu_custom_call.1} parent=1 // pred_fallthru
      _
    // Predicated region
    $region10: #{tpu_custom_call.1} parent=1 // pred_check
      _
    $region11: #{tpu_custom_call.1} parent=1 // pred_check_branch
      %20 = sbr.rel (0) target = $region13
    $region12: #{tpu_custom_call.1} parent=1 // pred_region
      _
    $region13: #{tpu_custom_call.1} parent=1 // pred_fallthru
      _
    %p21 = scmp.eq.s32.totalorder 0, 0
    %p22 = scmp.eq.s32.totalorder 0, 0
    %p23 = pnand %p21, %p22
    %p24 = pneg %p23
    // Predicated region
    $region14: #{tpu_custom_call.1} parent=1 // pred_check
      _
    $region15: #{tpu_custom_call.1} parent=1 // pred_check_branch
      %26 = sbr.rel (%p23) target = $region17
    $region16: #{tpu_custom_call.1} parent=1 // pred_region
      %v27 = vlaneseq
      %vm28 = vcmp.ge.s32.totalorder %v27, 0
      %vm29 = vcmp.lt.s32.totalorder %v27, 256
      %vm30 = vmand %vm28, %vm29
      %31 = vst.msk [vmem:[#allocation2] sm:$0x3] %vm30, -1e+30
      %32 = vst.msk [vmem:[#allocation3] sm:$0x3] %vm30, 0.0
      %33 = vst.msk [vmem:[#allocation4] sm:$0x3] %vm30, -1e+30
      %34 = vst.msk [vmem:[#allocation5] sm:$0x3] %vm30, 0.0
    $region17: #{tpu_custom_call.1} parent=1 // pred_fallthru
      _
    %v35 = vld [vmem:[%s1] sm:$0xff]
    %v36 = vld [vmem:[%s1 + $0x8] sm:$0xff]
    %v37 = vld [vmem:[%s1 + $0x10] sm:$0xff]
    %v38 = vld [vmem:[%s1 + $0x18] sm:$0xff]
    %v39 = vld [vmem:[%s1 + $0x20] sm:$0xff]
    %v40 = vld [vmem:[%s1 + $0x28] sm:$0xff]
    %v41 = vld [vmem:[%s1 + $0x30] sm:$0xff]
    %v42 = vld [vmem:[%s1 + $0x38] sm:$0xff]
    %v43 = vld [vmem:[%s1 + $0x40] sm:$0xff]
    %v44 = vld [vmem:[%s1 + $0x48] sm:$0xff]
    %v45 = vld [vmem:[%s1 + $0x50] sm:$0xff]
    %v46 = vld [vmem:[%s1 + $0x58] sm:$0xff]
    %v47 = vld [vmem:[%s1 + $0x60] sm:$0xff]
    %v48 = vld [vmem:[%s1 + $0x68] sm:$0xff]
    %v49 = vld [vmem:[%s1 + $0x70] sm:$0xff]
    %v50 = vld [vmem:[%s1 + $0x78] sm:$0xff]
    %v51 = vld [vmem:[%s1 + $0x80] sm:$0xff]
    %v52 = vld [vmem:[%s1 + $0x88] sm:$0xff]
    %v53 = vld [vmem:[%s1 + $0x90] sm:$0xff]
    %v54 = vld [vmem:[%s1 + $0x98] sm:$0xff]
    %v55 = vld [vmem:[%s1 + $0xa0] sm:$0xff]
    %v56 = vld [vmem:[%s1 + $0xa8] sm:$0xff]
    %v57 = vld [vmem:[%s1 + $0xb0] sm:$0xff]
    %v58 = vld [vmem:[%s1 + $0xb8] sm:$0xff]
    %v59 = vld [vmem:[%s1 + $0xc0] sm:$0xff]
    %v60 = vld [vmem:[%s1 + $0xc8] sm:$0xff]
    %v61 = vld [vmem:[%s1 + $0xd0] sm:$0xff]
    %v62 = vld [vmem:[%s1 + $0xd8] sm:$0xff]
    %v63 = vld [vmem:[%s1 + $0xe0] sm:$0xff]
    %v64 = vld [vmem:[%s1 + $0xe8] sm:$0xff]
    %v65 = vld [vmem:[%s1 + $0xf0] sm:$0xff]
    %v66 = vld [vmem:[%s1 + $0xf8] sm:$0xff]
    %v67 = vld [vmem:[%s2] sm:$0xff]
    %v68 = vld [vmem:[%s2 + $0x8] sm:$0xff]
    %v69 = vld [vmem:[%s2 + $0x10] sm:$0xff]
    %v70 = vld [vmem:[%s2 + $0x18] sm:$0xff]
    %v71 = vld [vmem:[%s2 + $0x20] sm:$0xff]
    %v72 = vld [vmem:[%s2 + $0x28] sm:$0xff]
    %v73 = vld [vmem:[%s2 + $0x30] sm:$0xff]
    %v74 = vld [vmem:[%s2 + $0x38] sm:$0xff]
    %v75 = vld [vmem:[%s2 + $0x40] sm:$0xff]
    %v76 = vld [vmem:[%s2 + $0x48] sm:$0xff]
    %v77 = vld [vmem:[%s2 + $0x50] sm:$0xff]
    %v78 = vld [vmem:[%s2 + $0x58] sm:$0xff]
    %v79 = vld [vmem:[%s2 + $0x60] sm:$0xff]
    %v80 = vld [vmem:[%s2 + $0x68] sm:$0xff]
    %v81 = vld [vmem:[%s2 + $0x70] sm:$0xff]
    %v82 = vld [vmem:[%s2 + $0x78] sm:$0xff]
    %v83 = vld [vmem:[%s2 + $0x80] sm:$0xff]
    %v84 = vld [vmem:[%s2 + $0x88] sm:$0xff]
    %v85 = vld [vmem:[%s2 + $0x90] sm:$0xff]
    %v86 = vld [vmem:[%s2 + $0x98] sm:$0xff]
    %v87 = vld [vmem:[%s2 + $0xa0] sm:$0xff]
    %v88 = vld [vmem:[%s2 + $0xa8] sm:$0xff]
    %v89 = vld [vmem:[%s2 + $0xb0] sm:$0xff]
    %v90 = vld [vmem:[%s2 + $0xb8] sm:$0xff]
    %v91 = vld [vmem:[%s2 + $0xc0] sm:$0xff]
    %v92 = vld [vmem:[%s2 + $0xc8] sm:$0xff]
    %v93 = vld [vmem:[%s2 + $0xd0] sm:$0xff]
    %v94 = vld [vmem:[%s2 + $0xd8] sm:$0xff]
    %v95 = vld [vmem:[%s2 + $0xe0] sm:$0xff]
    %v96 = vld [vmem:[%s2 + $0xe8] sm:$0xff]
    %v97 = vld [vmem:[%s2 + $0xf0] sm:$0xff]
    %v98 = vld [vmem:[%s2 + $0xf8] sm:$0xff]
    %vm99 = vcmask 523264
    %v101 = vsel %vm99, %v35, 0
    %v104 = vsel %vm99, %v36, 0
    %v107 = vsel %vm99, %v37, 0
    %v110 = vsel %vm99, %v38, 0
    %v113 = vsel %vm99, %v39, 0
    %v116 = vsel %vm99, %v40, 0
    %v119 = vsel %vm99, %v41, 0
    %v122 = vsel %vm99, %v42, 0
    %v125 = vsel %vm99, %v43, 0
    %v128 = vsel %vm99, %v44, 0
    %v131 = vsel %vm99, %v45, 0
    %v134 = vsel %vm99, %v46, 0
    %v137 = vsel %vm99, %v47, 0
    %v140 = vsel %vm99, %v48, 0
    %v143 = vsel %vm99, %v49, 0
    %v146 = vsel %vm99, %v50, 0
    %v149 = vsel %vm99, %v51, 0
    %v152 = vsel %vm99, %v52, 0
    %v155 = vsel %vm99, %v53, 0
    %v158 = vsel %vm99, %v54, 0
    %v161 = vsel %vm99, %v55, 0
    %v164 = vsel %vm99, %v56, 0
    %v167 = vsel %vm99, %v57, 0
    %v170 = vsel %vm99, %v58, 0
    %v173 = vsel %vm99, %v59, 0
    %v176 = vsel %vm99, %v60, 0
    %v179 = vsel %vm99, %v61, 0
    %v182 = vsel %vm99, %v62, 0
    %v185 = vsel %vm99, %v63, 0
    %v188 = vsel %vm99, %v64, 0
    %v191 = vsel %vm99, %v65, 0
    %v194 = vsel %vm99, %v66, 0
    %v197 = vsel %vm99, %v67, 0
    %v200 = vsel %vm99, %v68, 0
    %v203 = vsel %vm99, %v69, 0
    %v206 = vsel %vm99, %v70, 0
    %v209 = vsel %vm99, %v71, 0
    %v212 = vsel %vm99, %v72, 0
    %v215 = vsel %vm99, %v73, 0
    %v218 = vsel %vm99, %v74, 0
    %v221 = vsel %vm99, %v75, 0
    %v224 = vsel %vm99, %v76, 0
    %v227 = vsel %vm99, %v77, 0
    %v230 = vsel %vm99, %v78, 0
    %v233 = vsel %vm99, %v79, 0
    %v236 = vsel %vm99, %v80, 0
    %v239 = vsel %vm99, %v81, 0
    %v242 = vsel %vm99, %v82, 0
    %v245 = vsel %vm99, %v83, 0
    %v248 = vsel %vm99, %v84, 0
    %v251 = vsel %vm99, %v85, 0
    %v254 = vsel %vm99, %v86, 0
    %v257 = vsel %vm99, %v87, 0
    %v260 = vsel %vm99, %v88, 0
    %v263 = vsel %vm99, %v89, 0
    %v266 = vsel %vm99, %v90, 0
    %v269 = vsel %vm99, %v91, 0
    %v272 = vsel %vm99, %v92, 0
    %v275 = vsel %vm99, %v93, 0
    %v278 = vsel %vm99, %v94, 0
    %v281 = vsel %vm99, %v95, 0
    %v284 = vsel %vm99, %v96, 0
    %v287 = vsel %vm99, %v97, 0
    %v290 = vsel %vm99, %v98, 0
    %292 = vmatpush.xpose.msra.mxu0 %v242
    %293 = vmatpush.xpose.msra.mxu0 %v239
    %294 = vmatpush.xpose.msra.mxu0 %v236
    %295 = vmatpush.xpose.msra.mxu0 %v233
    %296 = vmatpush.xpose.msra.mxu0 %v230
    %297 = vmatpush.xpose.msra.mxu0 %v227
    %298 = vmatpush.xpose.msra.mxu0 %v224
    %299 = vmatpush.xpose.msra.mxu0 %v221
    %300 = vmatpush.xpose.msra.mxu0 %v218
    %301 = vmatpush.xpose.msra.mxu0 %v215
    %302 = vmatpush.xpose.msra.mxu0 %v212
    %303 = vmatpush.xpose.msra.mxu0 %v209
    %304 = vmatpush.xpose.msra.mxu0 %v206
    %305 = vmatpush.xpose.msra.mxu0 %v203
    %306 = vmatpush.xpose.msra.mxu0 %v200
    %307 = vmatpush.xpose.msra.mxu0 %v197
    %308 = vmatmul.f32.gmra.mxu0 %v101
    %v309 = vpop.f32.mrf.mxu0
    %v310 = vadd.f32 0.0, %v309
    %311 = vmatmul.f32.gmra.mxu0 %v104
    %v312 = vpop.f32.mrf.mxu0
    %v313 = vadd.f32 0.0, %v312
    %314 = vmatmul.f32.gmra.mxu0 %v107
    %v315 = vpop.f32.mrf.mxu0
    %v316 = vadd.f32 0.0, %v315
    %317 = vmatmul.f32.gmra.mxu0 %v110
    %v318 = vpop.f32.mrf.mxu0
    %v319 = vadd.f32 0.0, %v318
    %320 = vmatmul.f32.gmra.mxu0 %v113
    %v321 = vpop.f32.mrf.mxu0
    %v322 = vadd.f32 0.0, %v321
    %323 = vmatmul.f32.gmra.mxu0 %v116
    %v324 = vpop.f32.mrf.mxu0
    %v325 = vadd.f32 0.0, %v324
    %326 = vmatmul.f32.gmra.mxu0 %v119
    %v327 = vpop.f32.mrf.mxu0
    %v328 = vadd.f32 0.0, %v327
    %329 = vmatmul.f32.gmra.mxu0 %v122
    %v330 = vpop.f32.mrf.mxu0
    %v331 = vadd.f32 0.0, %v330
    %332 = vmatmul.f32.gmra.mxu0 %v125
    %v333 = vpop.f32.mrf.mxu0
    %v334 = vadd.f32 0.0, %v333
    %335 = vmatmul.f32.gmra.mxu0 %v128
    %v336 = vpop.f32.mrf.mxu0
    %v337 = vadd.f32 0.0, %v336
    %338 = vmatmul.f32.gmra.mxu0 %v131
    %v339 = vpop.f32.mrf.mxu0
    %v340 = vadd.f32 0.0, %v339
    %341 = vmatmul.f32.gmra.mxu0 %v134
    %v342 = vpop.f32.mrf.mxu0
    %v343 = vadd.f32 0.0, %v342
    %344 = vmatmul.f32.gmra.mxu0 %v137
    %v345 = vpop.f32.mrf.mxu0
    %v346 = vadd.f32 0.0, %v345
    %347 = vmatmul.f32.gmra.mxu0 %v140
    %v348 = vpop.f32.mrf.mxu0
    %v349 = vadd.f32 0.0, %v348
    %350 = vmatmul.f32.gmra.mxu0 %v143
    %v351 = vpop.f32.mrf.mxu0
    %v352 = vadd.f32 0.0, %v351
    %353 = vmatmul.f32.gmra.mxu0 %v146
    %v354 = vpop.f32.mrf.mxu0
    %v355 = vadd.f32 0.0, %v354
    %356 = vmatmul.f32.gmra.mxu0 %v149
    %v357 = vpop.f32.mrf.mxu0
    %v358 = vadd.f32 0.0, %v357
    %359 = vmatmul.f32.gmra.mxu0 %v152
    %v360 = vpop.f32.mrf.mxu0
    %v361 = vadd.f32 0.0, %v360
    %362 = vmatmul.f32.gmra.mxu0 %v155
    %v363 = vpop.f32.mrf.mxu0
    %v364 = vadd.f32 0.0, %v363
    %365 = vmatmul.f32.gmra.mxu0 %v158
    %v366 = vpop.f32.mrf.mxu0
    %v367 = vadd.f32 0.0, %v366
    %368 = vmatmul.f32.gmra.mxu0 %v161
    %v369 = vpop.f32.mrf.mxu0
    %v370 = vadd.f32 0.0, %v369
    %371 = vmatmul.f32.gmra.mxu0 %v164
    %v372 = vpop.f32.mrf.mxu0
    %v373 = vadd.f32 0.0, %v372
    %374 = vmatmul.f32.gmra.mxu0 %v167
    %v375 = vpop.f32.mrf.mxu0
    %v376 = vadd.f32 0.0, %v375
    %377 = vmatmul.f32.gmra.mxu0 %v170
    %v378 = vpop.f32.mrf.mxu0
    %v379 = vadd.f32 0.0, %v378
    %380 = vmatmul.f32.gmra.mxu0 %v173
    %v381 = vpop.f32.mrf.mxu0
    %v382 = vadd.f32 0.0, %v381
    %383 = vmatmul.f32.gmra.mxu0 %v176
    %v384 = vpop.f32.mrf.mxu0
    %v385 = vadd.f32 0.0, %v384
    %386 = vmatmul.f32.gmra.mxu0 %v179
    %v387 = vpop.f32.mrf.mxu0
    %v388 = vadd.f32 0.0, %v387
    %389 = vmatmul.f32.gmra.mxu0 %v182
    %v390 = vpop.f32.mrf.mxu0
    %v391 = vadd.f32 0.0, %v390
    %392 = vmatmul.f32.gmra.mxu0 %v185
    %v393 = vpop.f32.mrf.mxu0
    %v394 = vadd.f32 0.0, %v393
    %395 = vmatmul.f32.gmra.mxu0 %v188
    %v396 = vpop.f32.mrf.mxu0
    %v397 = vadd.f32 0.0, %v396
    %398 = vmatmul.f32.gmra.mxu0 %v191
    %v399 = vpop.f32.mrf.mxu0
    %v400 = vadd.f32 0.0, %v399
    %401 = vmatmul.f32.gmra.mxu0 %v194
    %v402 = vpop.f32.mrf.mxu0
    %v403 = vadd.f32 0.0, %v402
    %404 = vdwg.mxu0
    %405 = vmatpush.xpose.msra.mxu0 %v290
    %406 = vmatpush.xpose.msra.mxu0 %v287
    %407 = vmatpush.xpose.msra.mxu0 %v284
    %408 = vmatpush.xpose.msra.mxu0 %v281
    %409 = vmatpush.xpose.msra.mxu0 %v278
    %410 = vmatpush.xpose.msra.mxu0 %v275
    %411 = vmatpush.xpose.msra.mxu0 %v272
    %412 = vmatpush.xpose.msra.mxu0 %v269
    %413 = vmatpush.xpose.msra.mxu0 %v266
    %414 = vmatpush.xpose.msra.mxu0 %v263
    %415 = vmatpush.xpose.msra.mxu0 %v260
    %416 = vmatpush.xpose.msra.mxu0 %v257
    %417 = vmatpush.xpose.msra.mxu0 %v254
    %418 = vmatpush.xpose.msra.mxu0 %v251
    %419 = vmatpush.xpose.msra.mxu0 %v248
    %420 = vmatpush.xpose.msra.mxu0 %v245
    %421 = vmatmul.f32.gmra.mxu0 %v101
    %v422 = vpop.f32.mrf.mxu0
    %v423 = vadd.f32 0.0, %v422
    %424 = vmatmul.f32.gmra.mxu0 %v104
    %v425 = vpop.f32.mrf.mxu0
    %v426 = vadd.f32 0.0, %v425
    %427 = vmatmul.f32.gmra.mxu0 %v107
    %v428 = vpop.f32.mrf.mxu0
    %v429 = vadd.f32 0.0, %v428
    %430 = vmatmul.f32.gmra.mxu0 %v110
    %v431 = vpop.f32.mrf.mxu0
    %v432 = vadd.f32 0.0, %v431
    %433 = vmatmul.f32.gmra.mxu0 %v113
    %v434 = vpop.f32.mrf.mxu0
    %v435 = vadd.f32 0.0, %v434
    %436 = vmatmul.f32.gmra.mxu0 %v116
    %v437 = vpop.f32.mrf.mxu0
    %v438 = vadd.f32 0.0, %v437
    %439 = vmatmul.f32.gmra.mxu0 %v119
    %v440 = vpop.f32.mrf.mxu0
    %v441 = vadd.f32 0.0, %v440
    %442 = vmatmul.f32.gmra.mxu0 %v122
    %v443 = vpop.f32.mrf.mxu0
    %v444 = vadd.f32 0.0, %v443
    %445 = vmatmul.f32.gmra.mxu0 %v125
    %v446 = vpop.f32.mrf.mxu0
    %v447 = vadd.f32 0.0, %v446
    %448 = vmatmul.f32.gmra.mxu0 %v128
    %v449 = vpop.f32.mrf.mxu0
    %v450 = vadd.f32 0.0, %v449
    %451 = vmatmul.f32.gmra.mxu0 %v131
    %v452 = vpop.f32.mrf.mxu0
    %v453 = vadd.f32 0.0, %v452
    %454 = vmatmul.f32.gmra.mxu0 %v134
    %v455 = vpop.f32.mrf.mxu0
    %v456 = vadd.f32 0.0, %v455
    %457 = vmatmul.f32.gmra.mxu0 %v137
    %v458 = vpop.f32.mrf.mxu0
    %v459 = vadd.f32 0.0, %v458
    %460 = vmatmul.f32.gmra.mxu0 %v140
    %v461 = vpop.f32.mrf.mxu0
    %v462 = vadd.f32 0.0, %v461
    %463 = vmatmul.f32.gmra.mxu0 %v143
    %v464 = vpop.f32.mrf.mxu0
    %v465 = vadd.f32 0.0, %v464
    %466 = vmatmul.f32.gmra.mxu0 %v146
    %v467 = vpop.f32.mrf.mxu0
    %v468 = vadd.f32 0.0, %v467
    %469 = vmatmul.f32.gmra.mxu0 %v149
    %v470 = vpop.f32.mrf.mxu0
    %v471 = vadd.f32 0.0, %v470
    %472 = vmatmul.f32.gmra.mxu0 %v152
    %v473 = vpop.f32.mrf.mxu0
    %v474 = vadd.f32 0.0, %v473
    %475 = vmatmul.f32.gmra.mxu0 %v155
    %v476 = vpop.f32.mrf.mxu0
    %v477 = vadd.f32 0.0, %v476
    %478 = vmatmul.f32.gmra.mxu0 %v158
    %v479 = vpop.f32.mrf.mxu0
    %v480 = vadd.f32 0.0, %v479
    %481 = vmatmul.f32.gmra.mxu0 %v161
    %v482 = vpop.f32.mrf.mxu0
    %v483 = vadd.f32 0.0, %v482
    %484 = vmatmul.f32.gmra.mxu0 %v164
    %v485 = vpop.f32.mrf.mxu0
    %v486 = vadd.f32 0.0, %v485
    %487 = vmatmul.f32.gmra.mxu0 %v167
    %v488 = vpop.f32.mrf.mxu0
    %v489 = vadd.f32 0.0, %v488
    %490 = vmatmul.f32.gmra.mxu0 %v170
    %v491 = vpop.f32.mrf.mxu0
    %v492 = vadd.f32 0.0, %v491
    %493 = vmatmul.f32.gmra.mxu0 %v173
    %v494 = vpop.f32.mrf.mxu0
    %v495 = vadd.f32 0.0, %v494
    %496 = vmatmul.f32.gmra.mxu0 %v176
    %v497 = vpop.f32.mrf.mxu0
    %v498 = vadd.f32 0.0, %v497
    %499 = vmatmul.f32.gmra.mxu0 %v179
    %v500 = vpop.f32.mrf.mxu0
    %v501 = vadd.f32 0.0, %v500
    %502 = vmatmul.f32.gmra.mxu0 %v182
    %v503 = vpop.f32.mrf.mxu0
    %v504 = vadd.f32 0.0, %v503
    %505 = vmatmul.f32.gmra.mxu0 %v185
    %v506 = vpop.f32.mrf.mxu0
    %v507 = vadd.f32 0.0, %v506
    %508 = vmatmul.f32.gmra.mxu0 %v188
    %v509 = vpop.f32.mrf.mxu0
    %v510 = vadd.f32 0.0, %v509
    %511 = vmatmul.f32.gmra.mxu0 %v191
    %v512 = vpop.f32.mrf.mxu0
    %v513 = vadd.f32 0.0, %v512
    %514 = vmatmul.f32.gmra.mxu0 %v194
    %v515 = vpop.f32.mrf.mxu0
    %v516 = vadd.f32 0.0, %v515
    %517 = vdwg.mxu0
    %s518 = sld [smem:[#allocation7]]
    %v519 = vstv %s518
    %v520 = vmul.f32 %v310, %v519
    %v521 = vmul.f32 %v423, %v519
    %v522 = vmul.f32 %v313, %v519
    %v523 = vmul.f32 %v426, %v519
    %v524 = vmul.f32 %v316, %v519
    %v525 = vmul.f32 %v429, %v519
    %v526 = vmul.f32 %v319, %v519
    %v527 = vmul.f32 %v432, %v519
    %v528 = vmul.f32 %v322, %v519
    %v529 = vmul.f32 %v435, %v519
    %v530 = vmul.f32 %v325, %v519
    %v531 = vmul.f32 %v438, %v519
    %v532 = vmul.f32 %v328, %v519
    %v533 = vmul.f32 %v441, %v519
    %v534 = vmul.f32 %v331, %v519
    %v535 = vmul.f32 %v444, %v519
    %v536 = vmul.f32 %v334, %v519
    %v537 = vmul.f32 %v447, %v519
    %v538 = vmul.f32 %v337, %v519
    %v539 = vmul.f32 %v450, %v519
    %v540 = vmul.f32 %v340, %v519
    %v541 = vmul.f32 %v453, %v519
    %v542 = vmul.f32 %v343, %v519
    %v543 = vmul.f32 %v456, %v519
    %v544 = vmul.f32 %v346, %v519
    %v545 = vmul.f32 %v459, %v519
    %v546 = vmul.f32 %v349, %v519
    %v547 = vmul.f32 %v462, %v519
    %v548 = vmul.f32 %v352, %v519
    %v549 = vmul.f32 %v465, %v519
    %v550 = vmul.f32 %v355, %v519
    %v551 = vmul.f32 %v468, %v519
    %v552 = vmul.f32 %v358, %v519
    %v553 = vmul.f32 %v471, %v519
    %v554 = vmul.f32 %v361, %v519
    %v555 = vmul.f32 %v474, %v519
    %v556 = vmul.f32 %v364, %v519
    %v557 = vmul.f32 %v477, %v519
    %v558 = vmul.f32 %v367, %v519
    %v559 = vmul.f32 %v480, %v519
    %v560 = vmul.f32 %v370, %v519
    %v561 = vmul.f32 %v483, %v519
    %v562 = vmul.f32 %v373, %v519
    %v563 = vmul.f32 %v486, %v519
    %v564 = vmul.f32 %v376, %v519
    %v565 = vmul.f32 %v489, %v519
    %v566 = vmul.f32 %v379, %v519
    %v567 = vmul.f32 %v492, %v519
    %v568 = vmul.f32 %v382, %v519
    %v569 = vmul.f32 %v495, %v519
    %v570 = vmul.f32 %v385, %v519
    %v571 = vmul.f32 %v498, %v519
    %v572 = vmul.f32 %v388, %v519
    %v573 = vmul.f32 %v501, %v519
    %v574 = vmul.f32 %v391, %v519
    %v575 = vmul.f32 %v504, %v519
    %v576 = vmul.f32 %v394, %v519
    %v577 = vmul.f32 %v507, %v519
    %v578 = vmul.f32 %v397, %v519
    %v579 = vmul.f32 %v510, %v519
    %v580 = vmul.f32 %v400, %v519
    %v581 = vmul.f32 %v513, %v519
    %v582 = vmul.f32 %v403, %v519
    %v583 = vmul.f32 %v516, %v519
    %584 = vxpose.xlu0.b32.start [1/16] %v520, 128
    %585 = vxpose.xlu0.b32.cont [2/16] %v522, 128
    %586 = vxpose.xlu0.b32.cont [3/16] %v524, 128
    %587 = vxpose.xlu0.b32.cont [4/16] %v526, 128
    %588 = vxpose.xlu0.b32.cont [5/16] %v528, 128
    %589 = vxpose.xlu0.b32.cont [6/16] %v530, 128
    %590 = vxpose.xlu0.b32.cont [7/16] %v532, 128
    %591 = vxpose.xlu0.b32.cont [8/16] %v534, 128
    %592 = vxpose.xlu0.b32.cont [9/16] %v536, 128
    %593 = vxpose.xlu0.b32.cont [10/16] %v538, 128
    %594 = vxpose.xlu0.b32.cont [11/16] %v540, 128
    %595 = vxpose.xlu0.b32.cont [12/16] %v542, 128
    %596 = vxpose.xlu0.b32.cont [13/16] %v544, 128
    %597 = vxpose.xlu0.b32.cont [14/16] %v546, 128
    %598 = vxpose.xlu0.b32.cont [15/16] %v548, 128
    %599 = vxpose.xlu0.b32.end [16/16] %v550, 128
    %v600 = vpop.trf.xlu0
    %v601 = vpop.trf.xlu0
    %v602 = vpop.trf.xlu0
    %v603 = vpop.trf.xlu0
    %v604 = vpop.trf.xlu0
    %v605 = vpop.trf.xlu0
    %v606 = vpop.trf.xlu0
    %v607 = vpop.trf.xlu0
    %v608 = vpop.trf.xlu0
    %v609 = vpop.trf.xlu0
    %v610 = vpop.trf.xlu0
    %v611 = vpop.trf.xlu0
    %v612 = vpop.trf.xlu0
    %v613 = vpop.trf.xlu0
    %v614 = vpop.trf.xlu0
    %v615 = vpop.trf.xlu0
    %616 = vxpose.xlu0.b32.start [1/16] %v521, 128
    %617 = vxpose.xlu0.b32.cont [2/16] %v523, 128
    %618 = vxpose.xlu0.b32.cont [3/16] %v525, 128
    %619 = vxpose.xlu0.b32.cont [4/16] %v527, 128
    %620 = vxpose.xlu0.b32.cont [5/16] %v529, 128
    %621 = vxpose.xlu0.b32.cont [6/16] %v531, 128
    %622 = vxpose.xlu0.b32.cont [7/16] %v533, 128
    %623 = vxpose.xlu0.b32.cont [8/16] %v535, 128
    %624 = vxpose.xlu0.b32.cont [9/16] %v537, 128
    %625 = vxpose.xlu0.b32.cont [10/16] %v539, 128
    %626 = vxpose.xlu0.b32.cont [11/16] %v541, 128
    %627 = vxpose.xlu0.b32.cont [12/16] %v543, 128
    %628 = vxpose.xlu0.b32.cont [13/16] %v545, 128
    %629 = vxpose.xlu0.b32.cont [14/16] %v547, 128
    %630 = vxpose.xlu0.b32.cont [15/16] %v549, 128
    %631 = vxpose.xlu0.b32.end [16/16] %v551, 128
    %v632 = vpop.trf.xlu0
    %v633 = vpop.trf.xlu0
    %v634 = vpop.trf.xlu0
    %v635 = vpop.trf.xlu0
    %v636 = vpop.trf.xlu0
    %v637 = vpop.trf.xlu0
    %v638 = vpop.trf.xlu0
    %v639 = vpop.trf.xlu0
    %v640 = vpop.trf.xlu0
    %v641 = vpop.trf.xlu0
    %v642 = vpop.trf.xlu0
    %v643 = vpop.trf.xlu0
    %v644 = vpop.trf.xlu0
    %v645 = vpop.trf.xlu0
    %v646 = vpop.trf.xlu0
    %v647 = vpop.trf.xlu0
    %648 = vxpose.xlu0.b32.start [1/16] %v552, 128
    %649 = vxpose.xlu0.b32.cont [2/16] %v554, 128
    %650 = vxpose.xlu0.b32.cont [3/16] %v556, 128
    %651 = vxpose.xlu0.b32.cont [4/16] %v558, 128
    %652 = vxpose.xlu0.b32.cont [5/16] %v560, 128
    %653 = vxpose.xlu0.b32.cont [6/16] %v562, 128
    %654 = vxpose.xlu0.b32.cont [7/16] %v564, 128
    %655 = vxpose.xlu0.b32.cont [8/16] %v566, 128
    %656 = vxpose.xlu0.b32.cont [9/16] %v568, 128
    %657 = vxpose.xlu0.b32.cont [10/16] %v570, 128
    %658 = vxpose.xlu0.b32.cont [11/16] %v572, 128
    %659 = vxpose.xlu0.b32.cont [12/16] %v574, 128
    %660 = vxpose.xlu0.b32.cont [13/16] %v576, 128
    %661 = vxpose.xlu0.b32.cont [14/16] %v578, 128
    %662 = vxpose.xlu0.b32.cont [15/16] %v580, 128
    %663 = vxpose.xlu0.b32.end [16/16] %v582, 128
    %v664 = vpop.trf.xlu0
    %v665 = vpop.trf.xlu0
    %v666 = vpop.trf.xlu0
    %v667 = vpop.trf.xlu0
    %v668 = vpop.trf.xlu0
    %v669 = vpop.trf.xlu0
    %v670 = vpop.trf.xlu0
    %v671 = vpop.trf.xlu0
    %v672 = vpop.trf.xlu0
    %v673 = vpop.trf.xlu0
    %v674 = vpop.trf.xlu0
    %v675 = vpop.trf.xlu0
    %v676 = vpop.trf.xlu0
    %v677 = vpop.trf.xlu0
    %v678 = vpop.trf.xlu0
    %v679 = vpop.trf.xlu0
    %680 = vxpose.xlu0.b32.start [1/16] %v553, 128
    %681 = vxpose.xlu0.b32.cont [2/16] %v555, 128
    %682 = vxpose.xlu0.b32.cont [3/16] %v557, 128
    %683 = vxpose.xlu0.b32.cont [4/16] %v559, 128
    %684 = vxpose.xlu0.b32.cont [5/16] %v561, 128
    %685 = vxpose.xlu0.b32.cont [6/16] %v563, 128
    %686 = vxpose.xlu0.b32.cont [7/16] %v565, 128
    %687 = vxpose.xlu0.b32.cont [8/16] %v567, 128
    %688 = vxpose.xlu0.b32.cont [9/16] %v569, 128
    %689 = vxpose.xlu0.b32.cont [10/16] %v571, 128
    %690 = vxpose.xlu0.b32.cont [11/16] %v573, 128
    %691 = vxpose.xlu0.b32.cont [12/16] %v575, 128
    %692 = vxpose.xlu0.b32.cont [13/16] %v577, 128
    %693 = vxpose.xlu0.b32.cont [14/16] %v579, 128
    %694 = vxpose.xlu0.b32.cont [15/16] %v581, 128
    %695 = vxpose.xlu0.b32.end [16/16] %v583, 128
    %v696 = vpop.trf.xlu0
    %v697 = vpop.trf.xlu0
    %v698 = vpop.trf.xlu0
    %v699 = vpop.trf.xlu0
    %v700 = vpop.trf.xlu0
    %v701 = vpop.trf.xlu0
    %v702 = vpop.trf.xlu0
    %v703 = vpop.trf.xlu0
    %v704 = vpop.trf.xlu0
    %v705 = vpop.trf.xlu0
    %v706 = vpop.trf.xlu0
    %v707 = vpop.trf.xlu0
    %v708 = vpop.trf.xlu0
    %v709 = vpop.trf.xlu0
    %v710 = vpop.trf.xlu0
    %v711 = vpop.trf.xlu0
    %712 = vst [vmem:[#allocation8] sm:$0xff] %v520
    %713 = vst [vmem:[#allocation8 + $0x8] sm:$0xff] %v521
    %714 = vst [vmem:[#allocation8 + $0x10] sm:$0xff] %v522
    %715 = vst [vmem:[#allocation8 + $0x18] sm:$0xff] %v523
    %716 = vst [vmem:[#allocation8 + $0x20] sm:$0xff] %v524
    %717 = vst [vmem:[#allocation8 + $0x28] sm:$0xff] %v525
    %718 = vst [vmem:[#allocation8 + $0x30] sm:$0xff] %v526
    %719 = vst [vmem:[#allocation8 + $0x38] sm:$0xff] %v527
    %720 = vst [vmem:[#allocation8 + $0x40] sm:$0xff] %v528
    %721 = vst [vmem:[#allocation8 + $0x48] sm:$0xff] %v529
    %722 = vst [vmem:[#allocation8 + $0x50] sm:$0xff] %v530
    %723 = vst [vmem:[#allocation8 + $0x58] sm:$0xff] %v531
    %724 = vst [vmem:[#allocation8 + $0x60] sm:$0xff] %v532
    %725 = vst [vmem:[#allocation8 + $0x68] sm:$0xff] %v533
    %726 = vst [vmem:[#allocation8 + $0x70] sm:$0xff] %v534
    %727 = vst [vmem:[#allocation8 + $0x78] sm:$0xff] %v535
    %728 = vst [vmem:[#allocation8 + $0x80] sm:$0xff] %v536
    %729 = vst [vmem:[#allocation8 + $0x88] sm:$0xff] %v537
    %730 = vst [vmem:[#allocation8 + $0x90] sm:$0xff] %v538
    %731 = vst [vmem:[#allocation8 + $0x98] sm:$0xff] %v539
    %732 = vst [vmem:[#allocation8 + $0xa0] sm:$0xff] %v540
    %733 = vst [vmem:[#allocation8 + $0xa8] sm:$0xff] %v541
    %734 = vst [vmem:[#allocation8 + $0xb0] sm:$0xff] %v542
    %735 = vst [vmem:[#allocation8 + $0xb8] sm:$0xff] %v543
    %736 = vst [vmem:[#allocation8 + $0xc0] sm:$0xff] %v544
    %737 = vst [vmem:[#allocation8 + $0xc8] sm:$0xff] %v545
    %738 = vst [vmem:[#allocation8 + $0xd0] sm:$0xff] %v546
    %739 = vst [vmem:[#allocation8 + $0xd8] sm:$0xff] %v547
    %740 = vst [vmem:[#allocation8 + $0xe0] sm:$0xff] %v548
    %741 = vst [vmem:[#allocation8 + $0xe8] sm:$0xff] %v549
    %742 = vst [vmem:[#allocation8 + $0xf0] sm:$0xff] %v550
    %743 = vst [vmem:[#allocation8 + $0xf8] sm:$0xff] %v551
    %744 = vst [vmem:[#allocation8 + $0x100] sm:$0xff] %v552
    %745 = vst [vmem:[#allocation8 + $0x108] sm:$0xff] %v553
    %746 = vst [vmem:[#allocation8 + $0x110] sm:$0xff] %v554
    %747 = vst [vmem:[#allocation8 + $0x118] sm:$0xff] %v555
    %748 = vst [vmem:[#allocation8 + $0x120] sm:$0xff] %v556
    %749 = vst [vmem:[#allocation8 + $0x128] sm:$0xff] %v557
    %750 = vst [vmem:[#allocation8 + $0x130] sm:$0xff] %v558
    %751 = vst [vmem:[#allocation8 + $0x138] sm:$0xff] %v559
    %752 = vst [vmem:[#allocation8 + $0x140] sm:$0xff] %v560
    %753 = vst [vmem:[#allocation8 + $0x148] sm:$0xff] %v561
    %754 = vst [vmem:[#allocation8 + $0x150] sm:$0xff] %v562
    %755 = vst [vmem:[#allocation8 + $0x158] sm:$0xff] %v563
    %756 = vst [vmem:[#allocation8 + $0x160] sm:$0xff] %v564
    %757 = vst [vmem:[#allocation8 + $0x168] sm:$0xff] %v565
    %758 = vst [vmem:[#allocation8 + $0x170] sm:$0xff] %v566
    %759 = vst [vmem:[#allocation8 + $0x178] sm:$0xff] %v567
    %760 = vst [vmem:[#allocation8 + $0x180] sm:$0xff] %v568
    %761 = vst [vmem:[#allocation8 + $0x188] sm:$0xff] %v569
    %762 = vst [vmem:[#allocation8 + $0x190] sm:$0xff] %v570
    %763 = vst [vmem:[#allocation8 + $0x198] sm:$0xff] %v571
    %764 = vst [vmem:[#allocation8 + $0x1a0] sm:$0xff] %v572
    %765 = vst [vmem:[#allocation8 + $0x1a8] sm:$0xff] %v573
    %766 = vst [vmem:[#allocation8 + $0x1b0] sm:$0xff] %v574
    %767 = vst [vmem:[#allocation8 + $0x1b8] sm:$0xff] %v575
    %768 = vst [vmem:[#allocation8 + $0x1c0] sm:$0xff] %v576
    %769 = vst [vmem:[#allocation8 + $0x1c8] sm:$0xff] %v577
    %770 = vst [vmem:[#allocation8 + $0x1d0] sm:$0xff] %v578
    %771 = vst [vmem:[#allocation8 + $0x1d8] sm:$0xff] %v579
    %772 = vst [vmem:[#allocation8 + $0x1e0] sm:$0xff] %v580
    %773 = vst [vmem:[#allocation8 + $0x1e8] sm:$0xff] %v581
    %774 = vst [vmem:[#allocation8 + $0x1f0] sm:$0xff] %v582
    %775 = vst [vmem:[#allocation8 + $0x1f8] sm:$0xff] %v583
    %776 = vst [vmem:[#allocation11] sm:$0xff] %v600
    %777 = vst [vmem:[#allocation11 + $0x8] sm:$0xff] %v664
    %778 = vst [vmem:[#allocation11 + $0x10] sm:$0xff] %v601
    %779 = vst [vmem:[#allocation11 + $0x18] sm:$0xff] %v665
    %780 = vst [vmem:[#allocation11 + $0x20] sm:$0xff] %v602
    %781 = vst [vmem:[#allocation11 + $0x28] sm:$0xff] %v666
    %782 = vst [vmem:[#allocation11 + $0x30] sm:$0xff] %v603
    %783 = vst [vmem:[#allocation11 + $0x38] sm:$0xff] %v667
    %784 = vst [vmem:[#allocation11 + $0x40] sm:$0xff] %v604
    %785 = vst [vmem:[#allocation11 + $0x48] sm:$0xff] %v668
    %786 = vst [vmem:[#allocation11 + $0x50] sm:$0xff] %v605
    %787 = vst [vmem:[#allocation11 + $0x58] sm:$0xff] %v669
    %788 = vst [vmem:[#allocation11 + $0x60] sm:$0xff] %v606
    %789 = vst [vmem:[#allocation11 + $0x68] sm:$0xff] %v670
    %790 = vst [vmem:[#allocation11 + $0x70] sm:$0xff] %v607
    %791 = vst [vmem:[#allocation11 + $0x78] sm:$0xff] %v671
    %792 = vst [vmem:[#allocation11 + $0x80] sm:$0xff] %v608
    %793 = vst [vmem:[#allocation11 + $0x88] sm:$0xff] %v672
    %794 = vst [vmem:[#allocation11 + $0x90] sm:$0xff] %v609
    %795 = vst [vmem:[#allocation11 + $0x98] sm:$0xff] %v673
    %796 = vst [vmem:[#allocation11 + $0xa0] sm:$0xff] %v610
    %797 = vst [vmem:[#allocation11 + $0xa8] sm:$0xff] %v674
    %798 = vst [vmem:[#allocation11 + $0xb0] sm:$0xff] %v611
    %799 = vst [vmem:[#allocation11 + $0xb8] sm:$0xff] %v675
    %800 = vst [vmem:[#allocation11 + $0xc0] sm:$0xff] %v612
    %801 = vst [vmem:[#allocation11 + $0xc8] sm:$0xff] %v676
    %802 = vst [vmem:[#allocation11 + $0xd0] sm:$0xff] %v613
    %803 = vst [vmem:[#allocation11 + $0xd8] sm:$0xff] %v677
    %804 = vst [vmem:[#allocation11 + $0xe0] sm:$0xff] %v614
    %805 = vst [vmem:[#allocation11 + $0xe8] sm:$0xff] %v678
    %806 = vst [vmem:[#allocation11 + $0xf0] sm:$0xff] %v615
    %807 = vst [vmem:[#allocation11 + $0xf8] sm:$0xff] %v679
    %808 = vst [vmem:[#allocation11 + $0x100] sm:$0xff] %v632
    %809 = vst [vmem:[#allocation11 + $0x108] sm:$0xff] %v696
    %810 = vst [vmem:[#allocation11 + $0x110] sm:$0xff] %v633
    %811 = vst [vmem:[#allocation11 + $0x118] sm:$0xff] %v697
    %812 = vst [vmem:[#allocation11 + $0x120] sm:$0xff] %v634
    %813 = vst [vmem:[#allocation11 + $0x128] sm:$0xff] %v698
    %814 = vst [vmem:[#allocation11 + $0x130] sm:$0xff] %v635
    %815 = vst [vmem:[#allocation11 + $0x138] sm:$0xff] %v699
    %816 = vst [vmem:[#allocation11 + $0x140] sm:$0xff] %v636
    %817 = vst [vmem:[#allocation11 + $0x148] sm:$0xff] %v700
    %818 = vst [vmem:[#allocation11 + $0x150] sm:$0xff] %v637
    %819 = vst [vmem:[#allocation11 + $0x158] sm:$0xff] %v701
    %820 = vst [vmem:[#allocation11 + $0x160] sm:$0xff] %v638
    %821 = vst [vmem:[#allocation11 + $0x168] sm:$0xff] %v702
    %822 = vst [vmem:[#allocation11 + $0x170] sm:$0xff] %v639
    %823 = vst [vmem:[#allocation11 + $0x178] sm:$0xff] %v703
    %824 = vst [vmem:[#allocation11 + $0x180] sm:$0xff] %v640
    %825 = vst [vmem:[#allocation11 + $0x188] sm:$0xff] %v704
    %826 = vst [vmem:[#allocation11 + $0x190] sm:$0xff] %v641
    %827 = vst [vmem:[#allocation11 + $0x198] sm:$0xff] %v705
    %828 = vst [vmem:[#allocation11 + $0x1a0] sm:$0xff] %v642
    %829 = vst [vmem:[#allocation11 + $0x1a8] sm:$0xff] %v706
    %830 = vst [vmem:[#allocation11 + $0x1b0] sm:$0xff] %v643
    %831 = vst [vmem:[#allocation11 + $0x1b8] sm:$0xff] %v707
    %832 = vst [vmem:[#allocation11 + $0x1c0] sm:$0xff] %v644
    %833 = vst [vmem:[#allocation11 + $0x1c8] sm:$0xff] %v708
    %834 = vst [vmem:[#allocation11 + $0x1d0] sm:$0xff] %v645
    %835 = vst [vmem:[#allocation11 + $0x1d8] sm:$0xff] %v709
    %836 = vst [vmem:[#allocation11 + $0x1e0] sm:$0xff] %v646
    %837 = vst [vmem:[#allocation11 + $0x1e8] sm:$0xff] %v710
    %838 = vst [vmem:[#allocation11 + $0x1f0] sm:$0xff] %v647
    %839 = vst [vmem:[#allocation11 + $0x1f8] sm:$0xff] %v711
    %s840 = smul.u32 0, 256
    %s841 = smul.u32 0, 256
    %s842 = sshra.s32 %s840, 7
    %s843 = sand.u32 %s840, 127
    %s844 = scalar_lea.vmem [#allocation2], %s842
    %v845 = vld [vmem:[%s844] sm:$0x3]
    %s846 = scalar_lea.vmem [#allocation3], %s842
    %v847 = vld [vmem:[%s846] sm:$0x3]
    %v848 = vmax.f32 %v600, %v602
    %v849 = vmax.f32 %v601, %v603
    %v850 = vmax.f32 %v848, %v604
    %v851 = vmax.f32 %v849, %v605
    %v852 = vmax.f32 %v850, %v606
    %v853 = vmax.f32 %v851, %v607
    %v854 = vmax.f32 %v852, %v608
    %v855 = vmax.f32 %v853, %v609
    %v856 = vmax.f32 %v854, %v610
    %v857 = vmax.f32 %v855, %v611
    %v858 = vmax.f32 %v856, %v612
    %v859 = vmax.f32 %v857, %v613
    %v860 = vmax.f32 %v858, %v614
    %v861 = vmax.f32 %v859, %v615
    %v862 = vmax.f32 %v860, %v632
    %v863 = vmax.f32 %v861, %v633
    %v864 = vmax.f32 %v862, %v634
    %v865 = vmax.f32 %v863, %v635
    %v866 = vmax.f32 %v864, %v636
    %v867 = vmax.f32 %v865, %v637
    %v868 = vmax.f32 %v866, %v638
    %v869 = vmax.f32 %v867, %v639
    %v870 = vmax.f32 %v868, %v640
    %v871 = vmax.f32 %v869, %v641
    %v872 = vmax.f32 %v870, %v642
    %v873 = vmax.f32 %v871, %v643
    %v874 = vmax.f32 %v872, %v644
    %v875 = vmax.f32 %v873, %v645
    %v876 = vmax.f32 %v874, %v646
    %v877 = vmax.f32 %v875, %v647
    %v878 = vmax.f32 %v876, %v877
    %v879 = vrot.slane %v878, 4
    %v880 = vmax.f32 %v878, %v879
    %v881 = vrot.slane %v880, 2
    %v882 = vmax.f32 %v880, %v881
    %v883 = vrot.slane %v882, 1
    %v884 = vmax.f32 %v882, %v883
    %v885 = vmax.f32 %v664, %v666
    %v886 = vmax.f32 %v665, %v667
    %v887 = vmax.f32 %v885, %v668
    %v888 = vmax.f32 %v886, %v669
    %v889 = vmax.f32 %v887, %v670
    %v890 = vmax.f32 %v888, %v671
    %v891 = vmax.f32 %v889, %v672
    %v892 = vmax.f32 %v890, %v673
    %v893 = vmax.f32 %v891, %v674
    %v894 = vmax.f32 %v892, %v675
    %v895 = vmax.f32 %v893, %v676
    %v896 = vmax.f32 %v894, %v677
    %v897 = vmax.f32 %v895, %v678
    %v898 = vmax.f32 %v896, %v679
    %v899 = vmax.f32 %v897, %v696
    %v900 = vmax.f32 %v898, %v697
    %v901 = vmax.f32 %v899, %v698
    %v902 = vmax.f32 %v900, %v699
    %v903 = vmax.f32 %v901, %v700
    %v904 = vmax.f32 %v902, %v701
    %v905 = vmax.f32 %v903, %v702
    %v906 = vmax.f32 %v904, %v703
    %v907 = vmax.f32 %v905, %v704
    %v908 = vmax.f32 %v906, %v705
    %v909 = vmax.f32 %v907, %v706
    %v910 = vmax.f32 %v908, %v707
    %v911 = vmax.f32 %v909, %v708
    %v912 = vmax.f32 %v910, %v709
    %v913 = vmax.f32 %v911, %v710
    %v914 = vmax.f32 %v912, %v711
    %v915 = vmax.f32 %v913, %v914
    %v916 = vrot.slane %v915, 4
    %v917 = vmax.f32 %v915, %v916
    %v918 = vrot.slane %v917, 2
    %v919 = vmax.f32 %v917, %v918
    %v920 = vrot.slane %v919, 1
    %v921 = vmax.f32 %v919, %v920
    %v924 = vrot.slane %v921, 7
    %vm925 = vcmask 1040384
    %v926 = vsel %vm925, %v884, %v924
    %v928 = vmax.f32 %v845, %v926
    %v929 = vsub.f32 %v845, %v928
    %v930 = vmul.f32 %v929, 1.442695
    %v931 = vpow.pop %v930
    %v932 = vmul.f32 %v931, %v847
    %v934 = vperm.slane %v928, 0
    %v935 = vperm.slane %v928, 1
    %v938 = vsub.f32 %v600, %v934
    %v939 = vsub.f32 %v664, %v935
    %v940 = vsub.f32 %v601, %v934
    %v941 = vsub.f32 %v665, %v935
    %v942 = vsub.f32 %v602, %v934
    %v943 = vsub.f32 %v666, %v935
    %v944 = vsub.f32 %v603, %v934
    %v945 = vsub.f32 %v667, %v935
    %v946 = vsub.f32 %v604, %v934
    %v947 = vsub.f32 %v668, %v935
    %v948 = vsub.f32 %v605, %v934
    %v949 = vsub.f32 %v669, %v935
    %v950 = vsub.f32 %v606, %v934
    %v951 = vsub.f32 %v670, %v935
    %v952 = vsub.f32 %v607, %v934
    %v953 = vsub.f32 %v671, %v935
    %v954 = vsub.f32 %v608, %v934
    %v955 = vsub.f32 %v672, %v935
    %v956 = vsub.f32 %v609, %v934
    %v957 = vsub.f32 %v673, %v935
    %v958 = vsub.f32 %v610, %v934
    %v959 = vsub.f32 %v674, %v935
    %v960 = vsub.f32 %v611, %v934
    %v961 = vsub.f32 %v675, %v935
    %v962 = vsub.f32 %v612, %v934
    %v963 = vsub.f32 %v676, %v935
    %v964 = vsub.f32 %v613, %v934
    %v965 = vsub.f32 %v677, %v935
    %v966 = vsub.f32 %v614, %v934
    %v967 = vsub.f32 %v678, %v935
    %v968 = vsub.f32 %v615, %v934
    %v969 = vsub.f32 %v679, %v935
    %v970 = vsub.f32 %v632, %v934
    %v971 = vsub.f32 %v696, %v935
    %v972 = vsub.f32 %v633, %v934
    %v973 = vsub.f32 %v697, %v935
    %v974 = vsub.f32 %v634, %v934
    %v975 = vsub.f32 %v698, %v935
    %v976 = vsub.f32 %v635, %v934
    %v977 = vsub.f32 %v699, %v935
    %v978 = vsub.f32 %v636, %v934
    %v979 = vsub.f32 %v700, %v935
    %v980 = vsub.f32 %v637, %v934
    %v981 = vsub.f32 %v701, %v935
    %v982 = vsub.f32 %v638, %v934
    %v983 = vsub.f32 %v702, %v935
    %v984 = vsub.f32 %v639, %v934
    %v985 = vsub.f32 %v703, %v935
    %v986 = vsub.f32 %v640, %v934
    %v987 = vsub.f32 %v704, %v935
    %v988 = vsub.f32 %v641, %v934
    %v989 = vsub.f32 %v705, %v935
    %v990 = vsub.f32 %v642, %v934
    %v991 = vsub.f32 %v706, %v935
    %v992 = vsub.f32 %v643, %v934
    %v993 = vsub.f32 %v707, %v935
    %v994 = vsub.f32 %v644, %v934
    %v995 = vsub.f32 %v708, %v935
    %v996 = vsub.f32 %v645, %v934
    %v997 = vsub.f32 %v709, %v935
    %v998 = vsub.f32 %v646, %v934
    %v999 = vsub.f32 %v710, %v935
    %v1000 = vsub.f32 %v647, %v934
    %v1001 = vsub.f32 %v711, %v935
    %v1002 = vmul.f32 %v938, 1.442695
    %v1003 = vpow.pop %v1002
    %v1004 = vmul.f32 %v939, 1.442695
    %v1005 = vpow.pop %v1004
    %v1006 = vmul.f32 %v940, 1.442695
    %v1007 = vpow.pop %v1006
    %v1008 = vmul.f32 %v941, 1.442695
    %v1009 = vpow.pop %v1008
    %v1010 = vmul.f32 %v942, 1.442695
    %v1011 = vpow.pop %v1010
    %v1012 = vmul.f32 %v943, 1.442695
    %v1013 = vpow.pop %v1012
    %v1014 = vmul.f32 %v944, 1.442695
    %v1015 = vpow.pop %v1014
    %v1016 = vmul.f32 %v945, 1.442695
    %v1017 = vpow.pop %v1016
    %v1018 = vmul.f32 %v946, 1.442695
    %v1019 = vpow.pop %v1018
    %v1020 = vmul.f32 %v947, 1.442695
    %v1021 = vpow.pop %v1020
    %v1022 = vmul.f32 %v948, 1.442695
    %v1023 = vpow.pop %v1022
    %v1024 = vmul.f32 %v949, 1.442695
    %v1025 = vpow.pop %v1024
    %v1026 = vmul.f32 %v950, 1.442695
    %v1027 = vpow.pop %v1026
    %v1028 = vmul.f32 %v951, 1.442695
    %v1029 = vpow.pop %v1028
    %v1030 = vmul.f32 %v952, 1.442695
    %v1031 = vpow.pop %v1030
    %v1032 = vmul.f32 %v953, 1.442695
    %v1033 = vpow.pop %v1032
    %v1034 = vmul.f32 %v954, 1.442695
    %v1035 = vpow.pop %v1034
    %v1036 = vmul.f32 %v955, 1.442695
    %v1037 = vpow.pop %v1036
    %v1038 = vmul.f32 %v956, 1.442695
    %v1039 = vpow.pop %v1038
    %v1040 = vmul.f32 %v957, 1.442695
    %v1041 = vpow.pop %v1040
    %v1042 = vmul.f32 %v958, 1.442695
    %v1043 = vpow.pop %v1042
    %v1044 = vmul.f32 %v959, 1.442695
    %v1045 = vpow.pop %v1044
    %v1046 = vmul.f32 %v960, 1.442695
    %v1047 = vpow.pop %v1046
    %v1048 = vmul.f32 %v961, 1.442695
    %v1049 = vpow.pop %v1048
    %v1050 = vmul.f32 %v962, 1.442695
    %v1051 = vpow.pop %v1050
    %v1052 = vmul.f32 %v963, 1.442695
    %v1053 = vpow.pop %v1052
    %v1054 = vmul.f32 %v964, 1.442695
    %v1055 = vpow.pop %v1054
    %v1056 = vmul.f32 %v965, 1.442695
    %v1057 = vpow.pop %v1056
    %v1058 = vmul.f32 %v966, 1.442695
    %v1059 = vpow.pop %v1058
    %v1060 = vmul.f32 %v967, 1.442695
    %v1061 = vpow.pop %v1060
    %v1062 = vmul.f32 %v968, 1.442695
    %v1063 = vpow.pop %v1062
    %v1064 = vmul.f32 %v969, 1.442695
    %v1065 = vpow.pop %v1064
    %v1066 = vmul.f32 %v970, 1.442695
    %v1067 = vpow.pop %v1066
    %v1068 = vmul.f32 %v971, 1.442695
    %v1069 = vpow.pop %v1068
    %v1070 = vmul.f32 %v972, 1.442695
    %v1071 = vpow.pop %v1070
    %v1072 = vmul.f32 %v973, 1.442695
    %v1073 = vpow.pop %v1072
    %v1074 = vmul.f32 %v974, 1.442695
    %v1075 = vpow.pop %v1074
    %v1076 = vmul.f32 %v975, 1.442695
    %v1077 = vpow.pop %v1076
    %v1078 = vmul.f32 %v976, 1.442695
    %v1079 = vpow.pop %v1078
    %v1080 = vmul.f32 %v977, 1.442695
    %v1081 = vpow.pop %v1080
    %v1082 = vmul.f32 %v978, 1.442695
    %v1083 = vpow.pop %v1082
    %v1084 = vmul.f32 %v979, 1.442695
    %v1085 = vpow.pop %v1084
    %v1086 = vmul.f32 %v980, 1.442695
    %v1087 = vpow.pop %v1086
    %v1088 = vmul.f32 %v981, 1.442695
    %v1089 = vpow.pop %v1088
    %v1090 = vmul.f32 %v982, 1.442695
    %v1091 = vpow.pop %v1090
    %v1092 = vmul.f32 %v983, 1.442695
    %v1093 = vpow.pop %v1092
    %v1094 = vmul.f32 %v984, 1.442695
    %v1095 = vpow.pop %v1094
    %v1096 = vmul.f32 %v985, 1.442695
    %v1097 = vpow.pop %v1096
    %v1098 = vmul.f32 %v986, 1.442695
    %v1099 = vpow.pop %v1098
    %v1100 = vmul.f32 %v987, 1.442695
    %v1101 = vpow.pop %v1100
    %v1102 = vmul.f32 %v988, 1.442695
    %v1103 = vpow.pop %v1102
    %v1104 = vmul.f32 %v989, 1.442695
    %v1105 = vpow.pop %v1104
    %v1106 = vmul.f32 %v990, 1.442695
    %v1107 = vpow.pop %v1106
    %v1108 = vmul.f32 %v991, 1.442695
    %v1109 = vpow.pop %v1108
    %v1110 = vmul.f32 %v992, 1.442695
    %v1111 = vpow.pop %v1110
    %v1112 = vmul.f32 %v993, 1.442695
    %v1113 = vpow.pop %v1112
    %v1114 = vmul.f32 %v994, 1.442695
    %v1115 = vpow.pop %v1114
    %v1116 = vmul.f32 %v995, 1.442695
    %v1117 = vpow.pop %v1116
    %v1118 = vmul.f32 %v996, 1.442695
    %v1119 = vpow.pop %v1118
    %v1120 = vmul.f32 %v997, 1.442695
    %v1121 = vpow.pop %v1120
    %v1122 = vmul.f32 %v998, 1.442695
    %v1123 = vpow.pop %v1122
    %v1124 = vmul.f32 %v999, 1.442695
    %v1125 = vpow.pop %v1124
    %v1126 = vmul.f32 %v1000, 1.442695
    %v1127 = vpow.pop %v1126
    %v1128 = vmul.f32 %v1001, 1.442695
    %v1129 = vpow.pop %v1128
    %v1130 = vadd.f32 %v1003, %v1007
    %v1131 = vadd.f32 %v1130, %v1011
    %v1132 = vadd.f32 %v1131, %v1015
    %v1133 = vadd.f32 %v1132, %v1019
    %v1134 = vadd.f32 %v1133, %v1023
    %v1135 = vadd.f32 %v1134, %v1027
    %v1136 = vadd.f32 %v1135, %v1031
    %v1137 = vadd.f32 %v1136, %v1035
    %v1138 = vadd.f32 %v1137, %v1039
    %v1139 = vadd.f32 %v1138, %v1043
    %v1140 = vadd.f32 %v1139, %v1047
    %v1141 = vadd.f32 %v1140, %v1051
    %v1142 = vadd.f32 %v1141, %v1055
    %v1143 = vadd.f32 %v1142, %v1059
    %v1144 = vadd.f32 %v1143, %v1063
    %v1145 = vadd.f32 %v1144, %v1067
    %v1146 = vadd.f32 %v1145, %v1071
    %v1147 = vadd.f32 %v1146, %v1075
    %v1148 = vadd.f32 %v1147, %v1079
    %v1149 = vadd.f32 %v1148, %v1083
    %v1150 = vadd.f32 %v1149, %v1087
    %v1151 = vadd.f32 %v1150, %v1091
    %v1152 = vadd.f32 %v1151, %v1095
    %v1153 = vadd.f32 %v1152, %v1099
    %v1154 = vadd.f32 %v1153, %v1103
    %v1155 = vadd.f32 %v1154, %v1107
    %v1156 = vadd.f32 %v1155, %v1111
    %v1157 = vadd.f32 %v1156, %v1115
    %v1158 = vadd.f32 %v1157, %v1119
    %v1159 = vadd.f32 %v1158, %v1123
    %v1160 = vadd.f32 %v1159, %v1127
    %v1161 = vrot.slane %v1160, 4
    %v1162 = vadd.f32 %v1160, %v1161
    %v1163 = vrot.slane %v1162, 2
    %v1164 = vadd.f32 %v1162, %v1163
    %v1165 = vrot.slane %v1164, 1
    %v1166 = vadd.f32 %v1164, %v1165
    %v1167 = vadd.f32 %v1005, %v1009
    %v1168 = vadd.f32 %v1167, %v1013
    %v1169 = vadd.f32 %v1168, %v1017
    %v1170 = vadd.f32 %v1169, %v1021
    %v1171 = vadd.f32 %v1170, %v1025
    %v1172 = vadd.f32 %v1171, %v1029
    %v1173 = vadd.f32 %v1172, %v1033
    %v1174 = vadd.f32 %v1173, %v1037
    %v1175 = vadd.f32 %v1174, %v1041
    %v1176 = vadd.f32 %v1175, %v1045
    %v1177 = vadd.f32 %v1176, %v1049
    %v1178 = vadd.f32 %v1177, %v1053
    %v1179 = vadd.f32 %v1178, %v1057
    %v1180 = vadd.f32 %v1179, %v1061
    %v1181 = vadd.f32 %v1180, %v1065
    %v1182 = vadd.f32 %v1181, %v1069
    %v1183 = vadd.f32 %v1182, %v1073
    %v1184 = vadd.f32 %v1183, %v1077
    %v1185 = vadd.f32 %v1184, %v1081
    %v1186 = vadd.f32 %v1185, %v1085
    %v1187 = vadd.f32 %v1186, %v1089
    %v1188 = vadd.f32 %v1187, %v1093
    %v1189 = vadd.f32 %v1188, %v1097
    %v1190 = vadd.f32 %v1189, %v1101
    %v1191 = vadd.f32 %v1190, %v1105
    %v1192 = vadd.f32 %v1191, %v1109
    %v1193 = vadd.f32 %v1192, %v1113
    %v1194 = vadd.f32 %v1193, %v1117
    %v1195 = vadd.f32 %v1194, %v1121
    %v1196 = vadd.f32 %v1195, %v1125
    %v1197 = vadd.f32 %v1196, %v1129
    %v1198 = vrot.slane %v1197, 4
    %v1199 = vadd.f32 %v1197, %v1198
    %v1200 = vrot.slane %v1199, 2
    %v1201 = vadd.f32 %v1199, %v1200
    %v1202 = vrot.slane %v1201, 1
    %v1203 = vadd.f32 %v1201, %v1202
    %v1206 = vrot.slane %v1203, 7
    %v1207 = vsel %vm925, %v1166, %v1206
    %v1209 = vadd.f32 %v932, %v1207
    %v1210 = vlaneseq
    %vm1211 = vcmp.ge.s32.totalorder %v1210, 0
    %vm1212 = vcmp.lt.s32.totalorder %v1210, 256
    %vm1213 = vmand %vm1211, %vm1212
    %1214 = vst.msk [vmem:[%s844] sm:$0x3] %vm1213, %v928
    %1215 = vst.msk [vmem:[%s846] sm:$0x3] %vm1213, %v1209
    %s1216 = sshra.s32 %s841, 7
    %s1217 = sand.u32 %s841, 127
    %s1218 = scalar_lea.vmem [#allocation4], %s1216
    %v1219 = vld [vmem:[%s1218] sm:$0x3]
    %s1220 = scalar_lea.vmem [#allocation5], %s1216
    %v1221 = vld [vmem:[%s1220] sm:$0x3]
    %v1222 = vmax.f32 %v520, %v524
    %v1223 = vmax.f32 %v522, %v526
    %v1224 = vmax.f32 %v1222, %v528
    %v1225 = vmax.f32 %v1223, %v530
    %v1226 = vmax.f32 %v1224, %v532
    %v1227 = vmax.f32 %v1225, %v534
    %v1228 = vmax.f32 %v1226, %v536
    %v1229 = vmax.f32 %v1227, %v538
    %v1230 = vmax.f32 %v1228, %v540
    %v1231 = vmax.f32 %v1229, %v542
    %v1232 = vmax.f32 %v1230, %v544
    %v1233 = vmax.f32 %v1231, %v546
    %v1234 = vmax.f32 %v1232, %v548
    %v1235 = vmax.f32 %v1233, %v550
    %v1236 = vmax.f32 %v1234, %v552
    %v1237 = vmax.f32 %v1235, %v554
    %v1238 = vmax.f32 %v1236, %v556
    %v1239 = vmax.f32 %v1237, %v558
    %v1240 = vmax.f32 %v1238, %v560
    %v1241 = vmax.f32 %v1239, %v562
    %v1242 = vmax.f32 %v1240, %v564
    %v1243 = vmax.f32 %v1241, %v566
    %v1244 = vmax.f32 %v1242, %v568
    %v1245 = vmax.f32 %v1243, %v570
    %v1246 = vmax.f32 %v1244, %v572
    %v1247 = vmax.f32 %v1245, %v574
    %v1248 = vmax.f32 %v1246, %v576
    %v1249 = vmax.f32 %v1247, %v578
    %v1250 = vmax.f32 %v1248, %v580
    %v1251 = vmax.f32 %v1249, %v582
    %v1252 = vmax.f32 %v1250, %v1251
    %v1253 = vrot.slane %v1252, 4
    %v1254 = vmax.f32 %v1252, %v1253
    %v1255 = vrot.slane %v1254, 2
    %v1256 = vmax.f32 %v1254, %v1255
    %v1257 = vrot.slane %v1256, 1
    %v1258 = vmax.f32 %v1256, %v1257
    %v1259 = vmax.f32 %v521, %v525
    %v1260 = vmax.f32 %v523, %v527
    %v1261 = vmax.f32 %v1259, %v529
    %v1262 = vmax.f32 %v1260, %v531
    %v1263 = vmax.f32 %v1261, %v533
    %v1264 = vmax.f32 %v1262, %v535
    %v1265 = vmax.f32 %v1263, %v537
    %v1266 = vmax.f32 %v1264, %v539
    %v1267 = vmax.f32 %v1265, %v541
    %v1268 = vmax.f32 %v1266, %v543
    %v1269 = vmax.f32 %v1267, %v545
    %v1270 = vmax.f32 %v1268, %v547
    %v1271 = vmax.f32 %v1269, %v549
    %v1272 = vmax.f32 %v1270, %v551
    %v1273 = vmax.f32 %v1271, %v553
    %v1274 = vmax.f32 %v1272, %v555
    %v1275 = vmax.f32 %v1273, %v557
    %v1276 = vmax.f32 %v1274, %v559
    %v1277 = vmax.f32 %v1275, %v561
    %v1278 = vmax.f32 %v1276, %v563
    %v1279 = vmax.f32 %v1277, %v565
    %v1280 = vmax.f32 %v1278, %v567
    %v1281 = vmax.f32 %v1279, %v569
    %v1282 = vmax.f32 %v1280, %v571
    %v1283 = vmax.f32 %v1281, %v573
    %v1284 = vmax.f32 %v1282, %v575
    %v1285 = vmax.f32 %v1283, %v577
    %v1286 = vmax.f32 %v1284, %v579
    %v1287 = vmax.f32 %v1285, %v581
    %v1288 = vmax.f32 %v1286, %v583
    %v1289 = vmax.f32 %v1287, %v1288
    %v1290 = vrot.slane %v1289, 4
    %v1291 = vmax.f32 %v1289, %v1290
    %v1292 = vrot.slane %v1291, 2
    %v1293 = vmax.f32 %v1291, %v1292
    %v1294 = vrot.slane %v1293, 1
    %v1295 = vmax.f32 %v1293, %v1294
    %v1298 = vrot.slane %v1295, 7
    %v1299 = vsel %vm925, %v1258, %v1298
    %v1301 = vmax.f32 %v1219, %v1299
    %v1302 = vsub.f32 %v1219, %v1301
    %v1303 = vmul.f32 %v1302, 1.442695
    %v1304 = vpow.pop %v1303
    %v1305 = vmul.f32 %v1304, %v1221
    %v1307 = vperm.slane %v1301, 0
    %v1308 = vperm.slane %v1301, 1
    %v1311 = vsub.f32 %v520, %v1307
    %v1312 = vsub.f32 %v521, %v1308
    %v1313 = vsub.f32 %v522, %v1307
    %v1314 = vsub.f32 %v523, %v1308
    %v1315 = vsub.f32 %v524, %v1307
    %v1316 = vsub.f32 %v525, %v1308
    %v1317 = vsub.f32 %v526, %v1307
    %v1318 = vsub.f32 %v527, %v1308
    %v1319 = vsub.f32 %v528, %v1307
    %v1320 = vsub.f32 %v529, %v1308
    %v1321 = vsub.f32 %v530, %v1307
    %v1322 = vsub.f32 %v531, %v1308
    %v1323 = vsub.f32 %v532, %v1307
    %v1324 = vsub.f32 %v533, %v1308
    %v1325 = vsub.f32 %v534, %v1307
    %v1326 = vsub.f32 %v535, %v1308
    %v1327 = vsub.f32 %v536, %v1307
    %v1328 = vsub.f32 %v537, %v1308
    %v1329 = vsub.f32 %v538, %v1307
    %v1330 = vsub.f32 %v539, %v1308
    %v1331 = vsub.f32 %v540, %v1307
    %v1332 = vsub.f32 %v541, %v1308
    %v1333 = vsub.f32 %v542, %v1307
    %v1334 = vsub.f32 %v543, %v1308
    %v1335 = vsub.f32 %v544, %v1307
    %v1336 = vsub.f32 %v545, %v1308
    %v1337 = vsub.f32 %v546, %v1307
    %v1338 = vsub.f32 %v547, %v1308
    %v1339 = vsub.f32 %v548, %v1307
    %v1340 = vsub.f32 %v549, %v1308
    %v1341 = vsub.f32 %v550, %v1307
    %v1342 = vsub.f32 %v551, %v1308
    %v1343 = vsub.f32 %v552, %v1307
    %v1344 = vsub.f32 %v553, %v1308
    %v1345 = vsub.f32 %v554, %v1307
    %v1346 = vsub.f32 %v555, %v1308
    %v1347 = vsub.f32 %v556, %v1307
    %v1348 = vsub.f32 %v557, %v1308
    %v1349 = vsub.f32 %v558, %v1307
    %v1350 = vsub.f32 %v559, %v1308
    %v1351 = vsub.f32 %v560, %v1307
    %v1352 = vsub.f32 %v561, %v1308
    %v1353 = vsub.f32 %v562, %v1307
    %v1354 = vsub.f32 %v563, %v1308
    %v1355 = vsub.f32 %v564, %v1307
    %v1356 = vsub.f32 %v565, %v1308
    %v1357 = vsub.f32 %v566, %v1307
    %v1358 = vsub.f32 %v567, %v1308
    %v1359 = vsub.f32 %v568, %v1307
    %v1360 = vsub.f32 %v569, %v1308
    %v1361 = vsub.f32 %v570, %v1307
    %v1362 = vsub.f32 %v571, %v1308
    %v1363 = vsub.f32 %v572, %v1307
    %v1364 = vsub.f32 %v573, %v1308
    %v1365 = vsub.f32 %v574, %v1307
    %v1366 = vsub.f32 %v575, %v1308
    %v1367 = vsub.f32 %v576, %v1307
    %v1368 = vsub.f32 %v577, %v1308
    %v1369 = vsub.f32 %v578, %v1307
    %v1370 = vsub.f32 %v579, %v1308
    %v1371 = vsub.f32 %v580, %v1307
    %v1372 = vsub.f32 %v581, %v1308
    %v1373 = vsub.f32 %v582, %v1307
    %v1374 = vsub.f32 %v583, %v1308
    %v1375 = vmul.f32 %v1311, 1.442695
    %v1376 = vpow.pop %v1375
    %v1377 = vmul.f32 %v1312, 1.442695
    %v1378 = vpow.pop %v1377
    %v1379 = vmul.f32 %v1313, 1.442695
    %v1380 = vpow.pop %v1379
    %v1381 = vmul.f32 %v1314, 1.442695
    %v1382 = vpow.pop %v1381
    %v1383 = vmul.f32 %v1315, 1.442695
    %v1384 = vpow.pop %v1383
    %v1385 = vmul.f32 %v1316, 1.442695
    %v1386 = vpow.pop %v1385
    %v1387 = vmul.f32 %v1317, 1.442695
    %v1388 = vpow.pop %v1387
    %v1389 = vmul.f32 %v1318, 1.442695
    %v1390 = vpow.pop %v1389
    %v1391 = vmul.f32 %v1319, 1.442695
    %v1392 = vpow.pop %v1391
    %v1393 = vmul.f32 %v1320, 1.442695
    %v1394 = vpow.pop %v1393
    %v1395 = vmul.f32 %v1321, 1.442695
    %v1396 = vpow.pop %v1395
    %v1397 = vmul.f32 %v1322, 1.442695
    %v1398 = vpow.pop %v1397
    %v1399 = vmul.f32 %v1323, 1.442695
    %v1400 = vpow.pop %v1399
    %v1401 = vmul.f32 %v1324, 1.442695
    %v1402 = vpow.pop %v1401
    %v1403 = vmul.f32 %v1325, 1.442695
    %v1404 = vpow.pop %v1403
    %v1405 = vmul.f32 %v1326, 1.442695
    %v1406 = vpow.pop %v1405
    %v1407 = vmul.f32 %v1327, 1.442695
    %v1408 = vpow.pop %v1407
    %v1409 = vmul.f32 %v1328, 1.442695
    %v1410 = vpow.pop %v1409
    %v1411 = vmul.f32 %v1329, 1.442695
    %v1412 = vpow.pop %v1411
    %v1413 = vmul.f32 %v1330, 1.442695
    %v1414 = vpow.pop %v1413
    %v1415 = vmul.f32 %v1331, 1.442695
    %v1416 = vpow.pop %v1415
    %v1417 = vmul.f32 %v1332, 1.442695
    %v1418 = vpow.pop %v1417
    %v1419 = vmul.f32 %v1333, 1.442695
    %v1420 = vpow.pop %v1419
    %v1421 = vmul.f32 %v1334, 1.442695
    %v1422 = vpow.pop %v1421
    %v1423 = vmul.f32 %v1335, 1.442695
    %v1424 = vpow.pop %v1423
    %v1425 = vmul.f32 %v1336, 1.442695
    %v1426 = vpow.pop %v1425
    %v1427 = vmul.f32 %v1337, 1.442695
    %v1428 = vpow.pop %v1427
    %v1429 = vmul.f32 %v1338, 1.442695
    %v1430 = vpow.pop %v1429
    %v1431 = vmul.f32 %v1339, 1.442695
    %v1432 = vpow.pop %v1431
    %v1433 = vmul.f32 %v1340, 1.442695
    %v1434 = vpow.pop %v1433
    %v1435 = vmul.f32 %v1341, 1.442695
    %v1436 = vpow.pop %v1435
    %v1437 = vmul.f32 %v1342, 1.442695
    %v1438 = vpow.pop %v1437
    %v1439 = vmul.f32 %v1343, 1.442695
    %v1440 = vpow.pop %v1439
    %v1441 = vmul.f32 %v1344, 1.442695
    %v1442 = vpow.pop %v1441
    %v1443 = vmul.f32 %v1345, 1.442695
    %v1444 = vpow.pop %v1443
    %v1445 = vmul.f32 %v1346, 1.442695
    %v1446 = vpow.pop %v1445
    %v1447 = vmul.f32 %v1347, 1.442695
    %v1448 = vpow.pop %v1447
    %v1449 = vmul.f32 %v1348, 1.442695
    %v1450 = vpow.pop %v1449
    %v1451 = vmul.f32 %v1349, 1.442695
    %v1452 = vpow.pop %v1451
    %v1453 = vmul.f32 %v1350, 1.442695
    %v1454 = vpow.pop %v1453
    %v1455 = vmul.f32 %v1351, 1.442695
    %v1456 = vpow.pop %v1455
    %v1457 = vmul.f32 %v1352, 1.442695
    %v1458 = vpow.pop %v1457
    %v1459 = vmul.f32 %v1353, 1.442695
    %v1460 = vpow.pop %v1459
    %v1461 = vmul.f32 %v1354, 1.442695
    %v1462 = vpow.pop %v1461
    %v1463 = vmul.f32 %v1355, 1.442695
    %v1464 = vpow.pop %v1463
    %v1465 = vmul.f32 %v1356, 1.442695
    %v1466 = vpow.pop %v1465
    %v1467 = vmul.f32 %v1357, 1.442695
    %v1468 = vpow.pop %v1467
    %v1469 = vmul.f32 %v1358, 1.442695
    %v1470 = vpow.pop %v1469
    %v1471 = vmul.f32 %v1359, 1.442695
    %v1472 = vpow.pop %v1471
    %v1473 = vmul.f32 %v1360, 1.442695
    %v1474 = vpow.pop %v1473
    %v1475 = vmul.f32 %v1361, 1.442695
    %v1476 = vpow.pop %v1475
    %v1477 = vmul.f32 %v1362, 1.442695
    %v1478 = vpow.pop %v1477
    %v1479 = vmul.f32 %v1363, 1.442695
    %v1480 = vpow.pop %v1479
    %v1481 = vmul.f32 %v1364, 1.442695
    %v1482 = vpow.pop %v1481
    %v1483 = vmul.f32 %v1365, 1.442695
    %v1484 = vpow.pop %v1483
    %v1485 = vmul.f32 %v1366, 1.442695
    %v1486 = vpow.pop %v1485
    %v1487 = vmul.f32 %v1367, 1.442695
    %v1488 = vpow.pop %v1487
    %v1489 = vmul.f32 %v1368, 1.442695
    %v1490 = vpow.pop %v1489
    %v1491 = vmul.f32 %v1369, 1.442695
    %v1492 = vpow.pop %v1491
    %v1493 = vmul.f32 %v1370, 1.442695
    %v1494 = vpow.pop %v1493
    %v1495 = vmul.f32 %v1371, 1.442695
    %v1496 = vpow.pop %v1495
    %v1497 = vmul.f32 %v1372, 1.442695
    %v1498 = vpow.pop %v1497
    %v1499 = vmul.f32 %v1373, 1.442695
    %v1500 = vpow.pop %v1499
    %v1501 = vmul.f32 %v1374, 1.442695
    %v1502 = vpow.pop %v1501
    %v1503 = vadd.f32 %v1376, %v1380
    %v1504 = vadd.f32 %v1503, %v1384
    %v1505 = vadd.f32 %v1504, %v1388
    %v1506 = vadd.f32 %v1505, %v1392
    %v1507 = vadd.f32 %v1506, %v1396
    %v1508 = vadd.f32 %v1507, %v1400
    %v1509 = vadd.f32 %v1508, %v1404
    %v1510 = vadd.f32 %v1509, %v1408
    %v1511 = vadd.f32 %v1510, %v1412
    %v1512 = vadd.f32 %v1511, %v1416
    %v1513 = vadd.f32 %v1512, %v1420
    %v1514 = vadd.f32 %v1513, %v1424
    %v1515 = vadd.f32 %v1514, %v1428
    %v1516 = vadd.f32 %v1515, %v1432
    %v1517 = vadd.f32 %v1516, %v1436
    %v1518 = vadd.f32 %v1517, %v1440
    %v1519 = vadd.f32 %v1518, %v1444
    %v1520 = vadd.f32 %v1519, %v1448
    %v1521 = vadd.f32 %v1520, %v1452
    %v1522 = vadd.f32 %v1521, %v1456
    %v1523 = vadd.f32 %v1522, %v1460
    %v1524 = vadd.f32 %v1523, %v1464
    %v1525 = vadd.f32 %v1524, %v1468
    %v1526 = vadd.f32 %v1525, %v1472
    %v1527 = vadd.f32 %v1526, %v1476
    %v1528 = vadd.f32 %v1527, %v1480
    %v1529 = vadd.f32 %v1528, %v1484
    %v1530 = vadd.f32 %v1529, %v1488
    %v1531 = vadd.f32 %v1530, %v1492
    %v1532 = vadd.f32 %v1531, %v1496
    %v1533 = vadd.f32 %v1532, %v1500
    %v1534 = vrot.slane %v1533, 4
    %v1535 = vadd.f32 %v1533, %v1534
    %v1536 = vrot.slane %v1535, 2
    %v1537 = vadd.f32 %v1535, %v1536
    %v1538 = vrot.slane %v1537, 1
    %v1539 = vadd.f32 %v1537, %v1538
    %v1540 = vadd.f32 %v1378, %v1382
    %v1541 = vadd.f32 %v1540, %v1386
    %v1542 = vadd.f32 %v1541, %v1390
    %v1543 = vadd.f32 %v1542, %v1394
    %v1544 = vadd.f32 %v1543, %v1398
    %v1545 = vadd.f32 %v1544, %v1402
    %v1546 = vadd.f32 %v1545, %v1406
    %v1547 = vadd.f32 %v1546, %v1410
    %v1548 = vadd.f32 %v1547, %v1414
    %v1549 = vadd.f32 %v1548, %v1418
    %v1550 = vadd.f32 %v1549, %v1422
    %v1551 = vadd.f32 %v1550, %v1426
    %v1552 = vadd.f32 %v1551, %v1430
    %v1553 = vadd.f32 %v1552, %v1434
    %v1554 = vadd.f32 %v1553, %v1438
    %v1555 = vadd.f32 %v1554, %v1442
    %v1556 = vadd.f32 %v1555, %v1446
    %v1557 = vadd.f32 %v1556, %v1450
    %v1558 = vadd.f32 %v1557, %v1454
    %v1559 = vadd.f32 %v1558, %v1458
    %v1560 = vadd.f32 %v1559, %v1462
    %v1561 = vadd.f32 %v1560, %v1466
    %v1562 = vadd.f32 %v1561, %v1470
    %v1563 = vadd.f32 %v1562, %v1474
    %v1564 = vadd.f32 %v1563, %v1478
    %v1565 = vadd.f32 %v1564, %v1482
    %v1566 = vadd.f32 %v1565, %v1486
    %v1567 = vadd.f32 %v1566, %v1490
    %v1568 = vadd.f32 %v1567, %v1494
    %v1569 = vadd.f32 %v1568, %v1498
    %v1570 = vadd.f32 %v1569, %v1502
    %v1571 = vrot.slane %v1570, 4
    %v1572 = vadd.f32 %v1570, %v1571
    %v1573 = vrot.slane %v1572, 2
    %v1574 = vadd.f32 %v1572, %v1573
    %v1575 = vrot.slane %v1574, 1
    %v1576 = vadd.f32 %v1574, %v1575
    %v1579 = vrot.slane %v1576, 7
    %v1580 = vsel %vm925, %v1539, %v1579
    %v1582 = vadd.f32 %v1305, %v1580
    %1583 = vst.msk [vmem:[%s1218] sm:$0x3] %vm1213, %v1301
    %1584 = vst.msk [vmem:[%s1220] sm:$0x3] %vm1213, %v1582
    %p1585 = scmp.eq.s32.totalorder 0, 0
    // Predicated region
    $region18: #{tpu_custom_call.1} parent=1 // pred_check
      %p1586 = pneg %p1585
    $region19: #{tpu_custom_call.1} parent=1 // pred_check_branch
      %1588 = sbr.rel (%p1586) target = $region21
    $region20: #{tpu_custom_call.1} parent=1 // pred_region
      %v1589 = vlaneseq
      %v1590 = vshrl.u32 %v1589, 7
      %v1591 = vadd.s32 %v1590, 8
      %v1592 = vadd.s32 %v1590, 16
      %v1593 = vadd.s32 %v1590, 24
      %v1594 = vadd.s32 %v1590, 32
      %v1595 = vadd.s32 %v1590, 40
      %v1596 = vadd.s32 %v1590, 48
      %v1597 = vadd.s32 %v1590, 56
      %v1598 = vadd.s32 %v1590, 64
      %v1599 = vadd.s32 %v1590, 72
      %v1600 = vadd.s32 %v1590, 80
      %v1601 = vadd.s32 %v1590, 88
      %v1602 = vadd.s32 %v1590, 96
      %v1603 = vadd.s32 %v1590, 104
      %v1604 = vadd.s32 %v1590, 112
      %v1605 = vadd.s32 %v1590, 120
      %v1606 = vadd.s32 %v1590, 128
      %v1607 = vadd.s32 %v1590, 136
      %v1608 = vadd.s32 %v1590, 144
      %v1609 = vadd.s32 %v1590, 152
      %v1610 = vadd.s32 %v1590, 160
      %v1611 = vadd.s32 %v1590, 168
      %v1612 = vadd.s32 %v1590, 176
      %v1613 = vadd.s32 %v1590, 184
      %v1614 = vadd.s32 %v1590, 192
      %v1615 = vadd.s32 %v1590, 200
      %v1616 = vadd.s32 %v1590, 208
      %v1617 = vadd.s32 %v1590, 216
      %v1618 = vadd.s32 %v1590, 224
      %v1619 = vadd.s32 %v1590, 232
      %v1620 = vadd.s32 %v1590, 240
      %v1621 = vadd.s32 %v1590, 248
      %v1622 = vlaneseq
      %v1623 = vand.u32 %v1622, 127
      %v1624 = vadd.s32 %v1623, 128
      %vm1625 = vcmp.eq.s32.totalorder %v1590, %v1623
      %vm1626 = vcmp.eq.s32.totalorder %v1590, %v1624
      %vm1627 = vcmp.eq.s32.totalorder %v1591, %v1623
      %vm1628 = vcmp.eq.s32.totalorder %v1591, %v1624
      %vm1629 = vcmp.eq.s32.totalorder %v1592, %v1623
      %vm1630 = vcmp.eq.s32.totalorder %v1592, %v1624
      %vm1631 = vcmp.eq.s32.totalorder %v1593, %v1623
      %vm1632 = vcmp.eq.s32.totalorder %v1593, %v1624
      %vm1633 = vcmp.eq.s32.totalorder %v1594, %v1623
      %vm1634 = vcmp.eq.s32.totalorder %v1594, %v1624
      %vm1635 = vcmp.eq.s32.totalorder %v1595, %v1623
      %vm1636 = vcmp.eq.s32.totalorder %v1595, %v1624
      %vm1637 = vcmp.eq.s32.totalorder %v1596, %v1623
      %vm1638 = vcmp.eq.s32.totalorder %v1596, %v1624
      %vm1639 = vcmp.eq.s32.totalorder %v1597, %v1623
      %vm1640 = vcmp.eq.s32.totalorder %v1597, %v1624
      %vm1641 = vcmp.eq.s32.totalorder %v1598, %v1623
      %vm1642 = vcmp.eq.s32.totalorder %v1598, %v1624
      %vm1643 = vcmp.eq.s32.totalorder %v1599, %v1623
      %vm1644 = vcmp.eq.s32.totalorder %v1599, %v1624
      %vm1645 = vcmp.eq.s32.totalorder %v1600, %v1623
      %vm1646 = vcmp.eq.s32.totalorder %v1600, %v1624
      %vm1647 = vcmp.eq.s32.totalorder %v1601, %v1623
      %vm1648 = vcmp.eq.s32.totalorder %v1601, %v1624
      %vm1649 = vcmp.eq.s32.totalorder %v1602, %v1623
      %vm1650 = vcmp.eq.s32.totalorder %v1602, %v1624
      %vm1651 = vcmp.eq.s32.totalorder %v1603, %v1623
      %vm1652 = vcmp.eq.s32.totalorder %v1603, %v1624
      %vm1653 = vcmp.eq.s32.totalorder %v1604, %v1623
      %vm1654 = vcmp.eq.s32.totalorder %v1604, %v1624
      %vm1655 = vcmp.eq.s32.totalorder %v1605, %v1623
      %vm1656 = vcmp.eq.s32.totalorder %v1605, %v1624
      %vm1657 = vcmp.eq.s32.totalorder %v1606, %v1623
      %vm1658 = vcmp.eq.s32.totalorder %v1606, %v1624
      %vm1659 = vcmp.eq.s32.totalorder %v1607, %v1623
      %vm1660 = vcmp.eq.s32.totalorder %v1607, %v1624
      %vm1661 = vcmp.eq.s32.totalorder %v1608, %v1623
      %vm1662 = vcmp.eq.s32.totalorder %v1608, %v1624
      %vm1663 = vcmp.eq.s32.totalorder %v1609, %v1623
      %vm1664 = vcmp.eq.s32.totalorder %v1609, %v1624
      %vm1665 = vcmp.eq.s32.totalorder %v1610, %v1623
      %vm1666 = vcmp.eq.s32.totalorder %v1610, %v1624
      %vm1667 = vcmp.eq.s32.totalorder %v1611, %v1623
      %vm1668 = vcmp.eq.s32.totalorder %v1611, %v1624
      %vm1669 = vcmp.eq.s32.totalorder %v1612, %v1623
      %vm1670 = vcmp.eq.s32.totalorder %v1612, %v1624
      %vm1671 = vcmp.eq.s32.totalorder %v1613, %v1623
      %vm1672 = vcmp.eq.s32.totalorder %v1613, %v1624
      %vm1673 = vcmp.eq.s32.totalorder %v1614, %v1623
      %vm1674 = vcmp.eq.s32.totalorder %v1614, %v1624
      %vm1675 = vcmp.eq.s32.totalorder %v1615, %v1623
      %vm1676 = vcmp.eq.s32.totalorder %v1615, %v1624
      %vm1677 = vcmp.eq.s32.totalorder %v1616, %v1623
      %vm1678 = vcmp.eq.s32.totalorder %v1616, %v1624
      %vm1679 = vcmp.eq.s32.totalorder %v1617, %v1623
      %vm1680 = vcmp.eq.s32.totalorder %v1617, %v1624
      %vm1681 = vcmp.eq.s32.totalorder %v1618, %v1623
      %vm1682 = vcmp.eq.s32.totalorder %v1618, %v1624
      %vm1683 = vcmp.eq.s32.totalorder %v1619, %v1623
      %vm1684 = vcmp.eq.s32.totalorder %v1619, %v1624
      %vm1685 = vcmp.eq.s32.totalorder %v1620, %v1623
      %vm1686 = vcmp.eq.s32.totalorder %v1620, %v1624
      %vm1687 = vcmp.eq.s32.totalorder %v1621, %v1623
      %vm1688 = vcmp.eq.s32.totalorder %v1621, %v1624
      %v1689 = vsel %vm1625, %v520, 0.0
      %v1690 = vsel %vm1626, %v521, 0.0
      %v1691 = vsel %vm1627, %v522, 0.0
      %v1692 = vsel %vm1628, %v523, 0.0
      %v1693 = vsel %vm1629, %v524, 0.0
      %v1694 = vsel %vm1630, %v525, 0.0
      %v1695 = vsel %vm1631, %v526, 0.0
      %v1696 = vsel %vm1632, %v527, 0.0
      %v1697 = vsel %vm1633, %v528, 0.0
      %v1698 = vsel %vm1634, %v529, 0.0
      %v1699 = vsel %vm1635, %v530, 0.0
      %v1700 = vsel %vm1636, %v531, 0.0
      %v1701 = vsel %vm1637, %v532, 0.0
      %v1702 = vsel %vm1638, %v533, 0.0
      %v1703 = vsel %vm1639, %v534, 0.0
      %v1704 = vsel %vm1640, %v535, 0.0
      %v1705 = vsel %vm1641, %v536, 0.0
      %v1706 = vsel %vm1642, %v537, 0.0
      %v1707 = vsel %vm1643, %v538, 0.0
      %v1708 = vsel %vm1644, %v539, 0.0
      %v1709 = vsel %vm1645, %v540, 0.0
      %v1710 = vsel %vm1646, %v541, 0.0
      %v1711 = vsel %vm1647, %v542, 0.0
      %v1712 = vsel %vm1648, %v543, 0.0
      %v1713 = vsel %vm1649, %v544, 0.0
      %v1714 = vsel %vm1650, %v545, 0.0
      %v1715 = vsel %vm1651, %v546, 0.0
      %v1716 = vsel %vm1652, %v547, 0.0
      %v1717 = vsel %vm1653, %v548, 0.0
      %v1718 = vsel %vm1654, %v549, 0.0
      %v1719 = vsel %vm1655, %v550, 0.0
      %v1720 = vsel %vm1656, %v551, 0.0
      %v1721 = vsel %vm1657, %v552, 0.0
      %v1722 = vsel %vm1658, %v553, 0.0
      %v1723 = vsel %vm1659, %v554, 0.0
      %v1724 = vsel %vm1660, %v555, 0.0
      %v1725 = vsel %vm1661, %v556, 0.0
      %v1726 = vsel %vm1662, %v557, 0.0
      %v1727 = vsel %vm1663, %v558, 0.0
      %v1728 = vsel %vm1664, %v559, 0.0
      %v1729 = vsel %vm1665, %v560, 0.0
      %v1730 = vsel %vm1666, %v561, 0.0
      %v1731 = vsel %vm1667, %v562, 0.0
      %v1732 = vsel %vm1668, %v563, 0.0
      %v1733 = vsel %vm1669, %v564, 0.0
      %v1734 = vsel %vm1670, %v565, 0.0
      %v1735 = vsel %vm1671, %v566, 0.0
      %v1736 = vsel %vm1672, %v567, 0.0
      %v1737 = vsel %vm1673, %v568, 0.0
      %v1738 = vsel %vm1674, %v569, 0.0
      %v1739 = vsel %vm1675, %v570, 0.0
      %v1740 = vsel %vm1676, %v571, 0.0
      %v1741 = vsel %vm1677, %v572, 0.0
      %v1742 = vsel %vm1678, %v573, 0.0
      %v1743 = vsel %vm1679, %v574, 0.0
      %v1744 = vsel %vm1680, %v575, 0.0
      %v1745 = vsel %vm1681, %v576, 0.0
      %v1746 = vsel %vm1682, %v577, 0.0
      %v1747 = vsel %vm1683, %v578, 0.0
      %v1748 = vsel %vm1684, %v579, 0.0
      %v1749 = vsel %vm1685, %v580, 0.0
      %v1750 = vsel %vm1686, %v581, 0.0
      %v1751 = vsel %vm1687, %v582, 0.0
      %v1752 = vsel %vm1688, %v583, 0.0
      %v1753 = vadd.f32 %v1689, %v1691
      %v1754 = vadd.f32 %v1753, %v1693
      %v1755 = vadd.f32 %v1754, %v1695
      %v1756 = vadd.f32 %v1755, %v1697
      %v1757 = vadd.f32 %v1756, %v1699
      %v1758 = vadd.f32 %v1757, %v1701
      %v1759 = vadd.f32 %v1758, %v1703
      %v1760 = vadd.f32 %v1759, %v1705
      %v1761 = vadd.f32 %v1760, %v1707
      %v1762 = vadd.f32 %v1761, %v1709
      %v1763 = vadd.f32 %v1762, %v1711
      %v1764 = vadd.f32 %v1763, %v1713
      %v1765 = vadd.f32 %v1764, %v1715
      %v1766 = vadd.f32 %v1765, %v1717
      %v1767 = vadd.f32 %v1766, %v1719
      %v1768 = vadd.f32 %v1767, %v1721
      %v1769 = vadd.f32 %v1768, %v1723
      %v1770 = vadd.f32 %v1769, %v1725
      %v1771 = vadd.f32 %v1770, %v1727
      %v1772 = vadd.f32 %v1771, %v1729
      %v1773 = vadd.f32 %v1772, %v1731
      %v1774 = vadd.f32 %v1773, %v1733
      %v1775 = vadd.f32 %v1774, %v1735
      %v1776 = vadd.f32 %v1775, %v1737
      %v1777 = vadd.f32 %v1776, %v1739
      %v1778 = vadd.f32 %v1777, %v1741
      %v1779 = vadd.f32 %v1778, %v1743
      %v1780 = vadd.f32 %v1779, %v1745
      %v1781 = vadd.f32 %v1780, %v1747
      %v1782 = vadd.f32 %v1781, %v1749
      %v1783 = vadd.f32 %v1782, %v1751
      %v1784 = vrot.slane %v1783, 4
      %v1785 = vadd.f32 %v1783, %v1784
      %v1786 = vrot.slane %v1785, 2
      %v1787 = vadd.f32 %v1785, %v1786
      %v1788 = vrot.slane %v1787, 1
      %v1789 = vadd.f32 %v1787, %v1788
      %v1790 = vadd.f32 %v1690, %v1692
      %v1791 = vadd.f32 %v1790, %v1694
      %v1792 = vadd.f32 %v1791, %v1696
      %v1793 = vadd.f32 %v1792, %v1698
      %v1794 = vadd.f32 %v1793, %v1700
      %v1795 = vadd.f32 %v1794, %v1702
      %v1796 = vadd.f32 %v1795, %v1704
      %v1797 = vadd.f32 %v1796, %v1706
      %v1798 = vadd.f32 %v1797, %v1708
      %v1799 = vadd.f32 %v1798, %v1710
      %v1800 = vadd.f32 %v1799, %v1712
      %v1801 = vadd.f32 %v1800, %v1714
      %v1802 = vadd.f32 %v1801, %v1716
      %v1803 = vadd.f32 %v1802, %v1718
      %v1804 = vadd.f32 %v1803, %v1720
      %v1805 = vadd.f32 %v1804, %v1722
      %v1806 = vadd.f32 %v1805, %v1724
      %v1807 = vadd.f32 %v1806, %v1726
      %v1808 = vadd.f32 %v1807, %v1728
      %v1809 = vadd.f32 %v1808, %v1730
      %v1810 = vadd.f32 %v1809, %v1732
      %v1811 = vadd.f32 %v1810, %v1734
      %v1812 = vadd.f32 %v1811, %v1736
      %v1813 = vadd.f32 %v1812, %v1738
      %v1814 = vadd.f32 %v1813, %v1740
      %v1815 = vadd.f32 %v1814, %v1742
      %v1816 = vadd.f32 %v1815, %v1744
      %v1817 = vadd.f32 %v1816, %v1746
      %v1818 = vadd.f32 %v1817, %v1748
      %v1819 = vadd.f32 %v1818, %v1750
      %v1820 = vadd.f32 %v1819, %v1752
      %v1821 = vrot.slane %v1820, 4
      %v1822 = vadd.f32 %v1820, %v1821
      %v1823 = vrot.slane %v1822, 2
      %v1824 = vadd.f32 %v1822, %v1823
      %v1825 = vrot.slane %v1824, 1
      %v1826 = vadd.f32 %v1824, %v1825
      %v1829 = vrot.slane %v1826, 7
      %v1830 = vsel %vm925, %v1789, %v1829
      %s1832 = scalar_lea.vmem [#allocation6], %s842
      %1833 = vst.msk [vmem:[%s1832] sm:$0x3] %vm1213, %v1830
    $region21: #{tpu_custom_call.1} parent=1 // pred_fallthru
      _
    // Predicated region
    $region22: #{tpu_custom_call.1} parent=1 // pred_check
      _
    $region23: #{tpu_custom_call.1} parent=1 // pred_check_branch
      %1835 = sbr.rel (%p23) target = $region25
    $region24: #{tpu_custom_call.1} parent=1 // pred_region
      %v1836 = vld [vmem:[#allocation2] sm:$0x3]
      %v1837 = vld [vmem:[#allocation3] sm:$0x3]
      %v1838 = vlog2.pop %v1837
      %v1839 = vmul.f32 %v1838, 0.6931472
      %v1840 = vadd.f32 %v1836, %v1839
      %v1841 = vld [vmem:[#allocation4] sm:$0x3]
      %v1842 = vld [vmem:[#allocation5] sm:$0x3]
      %v1843 = vlog2.pop %v1842
      %v1844 = vmul.f32 %v1843, 0.6931472
      %v1845 = vadd.f32 %v1841, %v1844
      %v1847 = vperm.slane %v1840, 0
      %v1848 = vperm.slane %v1840, 1
      %v1851 = vsel %vm925, %v1847, 0.0
      %v1852 = vsel %vm925, %v1848, 0.0
      %v1853 = vadd.f32 %v1851, %v1852
      %1854 = vadd.xlane.f32.xlu0 %v1853
      %v1855 = vpop.xlane.xlu0 %1854
      %v1856 = vrot.slane %v1855, 4
      %v1857 = vadd.f32 %v1855, %v1856
      %v1858 = vrot.slane %v1857, 2
      %v1859 = vadd.f32 %v1857, %v1858
      %v1860 = vrot.slane %v1859, 1
      %v1861 = vadd.f32 %v1859, %v1860
      %s1862 = vtos %v1861
      %v1864 = vperm.slane %v1845, 0
      %v1865 = vperm.slane %v1845, 1
      %v1868 = vsel %vm925, %v1864, 0.0
      %v1869 = vsel %vm925, %v1865, 0.0
      %v1870 = vadd.f32 %v1868, %v1869
      %1871 = vadd.xlane.f32.xlu0 %v1870
      %v1872 = vpop.xlane.xlu0 %1871
      %v1873 = vrot.slane %v1872, 4
      %v1874 = vadd.f32 %v1872, %v1873
      %v1875 = vrot.slane %v1874, 2
      %v1876 = vadd.f32 %v1874, %v1875
      %v1877 = vrot.slane %v1876, 1
      %v1878 = vadd.f32 %v1876, %v1877
      %s1879 = vtos %v1878
      %v1880 = vld [vmem:[#allocation6] sm:$0x3]
      %v1882 = vperm.slane %v1880, 0
      %v1883 = vperm.slane %v1880, 1
      %v1886 = vsel %vm925, %v1882, 0.0
      %v1887 = vsel %vm925, %v1883, 0.0
      %v1888 = vadd.f32 %v1886, %v1887
      %1889 = vadd.xlane.f32.xlu0 %v1888
      %v1890 = vpop.xlane.xlu0 %1889
      %v1891 = vrot.slane %v1890, 4
      %v1892 = vadd.f32 %v1890, %v1891
      %v1893 = vrot.slane %v1892, 2
      %v1894 = vadd.f32 %v1892, %v1893
      %v1895 = vrot.slane %v1894, 1
      %v1896 = vadd.f32 %v1894, %v1895
      %s1897 = vtos %v1896
      %s1898 = sadd.f32 %s1862, %s1879
      %s1899 = smul.f32 %s1897, 2.0
      %s1900 = ssub.f32 %s1898, %s1899
      %v1901 = vrcp.pop 512.0
      %v1902 = vmul.f32 512.0, %v1901
      %v1903 = vsub.f32 1.0, %v1902
      %v1904 = vmul.f32 %v1901, %v1903
      %v1905 = vadd.f32 %v1901, %v1904
      %vm1906 = vweird.f32 %v1901
      %v1907 = vsel %vm1906, %v1901, %v1905
      %s1908 = vtos %v1907
      %s1909 = smul.f32 %s1900, %s1908
      %s1910 = scalar_lea.smem [#allocation13], 0
      %1911 = sst [smem:[%s1910]] %s1909
    $region25: #{tpu_custom_call.1} parent=1 // pred_fallthru
      _
    // Predicated region
    $region26: #{tpu_custom_call.1} parent=1 // pred_check
      _
    $region27: #{tpu_custom_call.1} parent=1 // pred_check_branch
      %1913 = sbr.rel (0) target = $region29
    $region28: #{tpu_custom_call.1} parent=1 // pred_region
      %1915 = vsyncadd [#allocation9], 0
      %s1916 = sshll.u32 [#allocation8], 4
      %s1917 = int_to_ptr.vmem [resolvable:$true] %s1916
      %s1918 = sshll.u32 %s3, 4
      %s1919 = int_to_ptr.hbm [resolvable:$true] %s1918
      %1924 = dma.vmem_to_hbm [thread:$0]  %s1917, 8192, %s1919, [#allocation9], 256, 256, 16
    $region29: #{tpu_custom_call.1} parent=1 // pred_fallthru
      _
    // Predicated region
    $region30: #{tpu_custom_call.1} parent=1 // pred_check
      _
    $region31: #{tpu_custom_call.1} parent=1 // pred_check_branch
      %1926 = sbr.rel (0) target = $region33
    $region32: #{tpu_custom_call.1} parent=1 // pred_region
      %1928 = vsyncadd [#allocation12], 0
      %s1929 = sshll.u32 [#allocation11], 4
      %s1930 = int_to_ptr.vmem [resolvable:$true] %s1929
      %s1931 = sshll.u32 %s4, 4
      %s1932 = int_to_ptr.hbm [resolvable:$true] %s1931
      %1937 = dma.vmem_to_hbm [thread:$0]  %s1930, 8192, %s1932, [#allocation12], 256, 256, 16
    $region33: #{tpu_custom_call.1} parent=1 // pred_fallthru
      _
    // Predicated region
    $region34: #{tpu_custom_call.1} parent=1 // pred_check
      _
    $region35: #{tpu_custom_call.1} parent=1 // pred_check_branch
      %1939 = sbr.rel (0) target = $region37
    $region36: #{tpu_custom_call.1} parent=1 // pred_region
      %1941 = vsyncadd [#allocation10], 0
      %s1943 = sshll.u32 %s5, 4
      %s1944 = int_to_ptr.hbm [resolvable:$true] %s1943
      %1946 = dma.smem_to_hbm [#allocation13], 16, %s1944, [#allocation10]
    $region37: #{tpu_custom_call.1} parent=1 // pred_fallthru
      _
    // Predicated region
    $region38: #{tpu_custom_call.1} parent=1 // pred_check
      _
    $region39: #{tpu_custom_call.1} parent=1 // pred_check_branch
      %1948 = sbr.rel (0) target = $region41
    $region40: #{tpu_custom_call.1} parent=1 // pred_region
      %1950 = dma.done [#allocation9], 8192
    $region41: #{tpu_custom_call.1} parent=1 // pred_fallthru
      _
    // Predicated region
    $region42: #{tpu_custom_call.1} parent=1 // pred_check
      _
    $region43: #{tpu_custom_call.1} parent=1 // pred_check_branch
      %1952 = sbr.rel (0) target = $region45
    $region44: #{tpu_custom_call.1} parent=1 // pred_region
      %1954 = dma.done [#allocation12], 8192
    $region45: #{tpu_custom_call.1} parent=1 // pred_fallthru
      _
    // Predicated region
    $region46: #{tpu_custom_call.1} parent=1 // pred_check
      _
    $region47: #{tpu_custom_call.1} parent=1 // pred_check_branch
      %1956 = sbr.rel (0) target = $region49
    $region48: #{tpu_custom_call.1} parent=1 // pred_region
      %1958 = dma.done [#allocation10], 16
    $region49: #{tpu_custom_call.1} parent=1 // pred_fallthru
      _
    %1959 = sfence
    %1960 = vsyncpa [#allocation9], 1
    %1961 = vsyncpa [#allocation12], 1
    %1962 = vsyncpa [#allocation10], 1

</llo_original>
